<compile_context>
chip_gen: v7x
topology: tpu7x:2x2x1
jax: 0.10.0
libtpu: 0.0.40
codegen_flags: <defaults>
</compile_context>

<pallas_src>
import jax
import jax.numpy as jnp
from jax.experimental import pallas as pl
from jax.experimental.pallas import tpu as pltpu

EPS = 1e-5
LANE = 128


def _round_up(n, m):
    return ((n + m - 1) // m) * m


# ----------------------------------------------------------------------------
# Fully fused LinearBlock kernel (all 5 layers, VMEM-resident activations).
#   lin1:       BN -> Linear
#   lin2..lin5: BN -> PReLU -> Linear
#   x = lin1(x); x = (lin3(lin2(x)) + x)/2; x = (lin4(x) + x)/2; x = lin5(x)
# ----------------------------------------------------------------------------
def _fused_linear_block_kernel(nvalid_ref, alphas_ref, x_ref,
                               bn1_ref, bn25_ref,
                               w1_ref, w2_ref, w3_ref, w4_ref, w5_ref,
                               b14_ref, b5_ref, o_ref):
    nv = nvalid_ref[0]                                   # valid-row count (SMEM)
    nvf = nv.astype(jnp.float32)
    n_rows = x_ref.shape[0]
    row_ids = jax.lax.broadcasted_iota(jnp.int32, (n_rows, 1), 0)
    mask_f = (row_ids < nv).astype(jnp.float32)          # (Np, 1): 1 for valid rows

    def layer(z, gamma, beta, w_ref, bias, alpha=None):
        # Training-mode BN stats over valid rows only (single on-chip pass, f32).
        zm = z * mask_f
        mean = jnp.sum(zm, axis=0, keepdims=True) / nvf
        var = jnp.sum(zm * zm, axis=0, keepdims=True) / nvf - mean * mean
        var = jnp.maximum(var, 0.0)                      # guard E[x^2]-m^2 cancellation
        inv = gamma * jax.lax.rsqrt(var + EPS)           # padded lanes: gamma=0 -> 0
        zh = z * inv + (beta - mean * inv)               # BN apply (VPU, f32)
        if alpha is not None:                            # PReLU (scalar slope from SMEM)
            zh = jnp.where(zh >= 0.0, zh, alpha * zh)
        # MXU: bf16 operands, f32 accumulation.
        return jnp.dot(zh.astype(jnp.bfloat16), w_ref[...],
                       preferred_element_type=jnp.float32) + bias

    x = x_ref[...]
    # lin1: BN -> Linear (no activation)
    h1 = layer(x, bn1_ref[0:1, :], bn1_ref[1:2, :], w1_ref, b14_ref[0:1, :])
    # lin2
    x2 = layer(h1, bn25_ref[0:1, :], bn25_ref[1:2, :], w2_ref, b14_ref[1:2, :],
               alphas_ref[0])
    # x = (lin3(lin2(x)) + x) / 2
    h = (layer(x2, bn25_ref[2:3, :], bn25_ref[3:4, :], w3_ref, b14_ref[2:3, :],
               alphas_ref[1]) + h1) * 0.5
    # x = (lin4(x) + x) / 2
    h = (layer(h, bn25_ref[4:5, :], bn25_ref[5:6, :], w4_ref, b14_ref[3:4, :],
               alphas_ref[2]) + h) * 0.5
    # lin5
    o_ref[...] = layer(h, bn25_ref[6:7, :], bn25_ref[7:8, :], w5_ref,
                       b5_ref[...], alphas_ref[3])


# ----------------------------------------------------------------------------
# LinearBlock wrapper: one pallas_call, everything VMEM-resident.
# ----------------------------------------------------------------------------
def linear_block(x, lin):
    n, f = x.shape
    fp, sp = lin["w1"].shape                       # padded F (128), padded 6F (256)
    n_rows = max(_round_up(n, 16), 16)             # bf16-sublane-friendly row padding
    x_pad = jnp.zeros((n_rows, fp), jnp.float32).at[:n, :f].set(x)
    nvalid = jnp.full((1,), n, jnp.int32)

    # VMEM budget: weights (bf16) + live f32 activation temporaries + misc.
    w_bytes = (fp * sp + 3 * sp * sp + sp * fp) * 2
    act_bytes = n_rows * (2 * fp + 6 * sp) * 4
    est = w_bytes + act_bytes + (2 << 20)
    # TODO(synk): above ~48 MiB fall back to a streamed per-layer pipeline
    # (per-tile partial BN stats, row-parallel grid for v7x's two TensorCores).
    assert est <= (48 << 20), "node count too large for the fused VMEM-resident kernel"

    smem = pl.BlockSpec(memory_space=pltpu.MemorySpace.SMEM)
    vmem = pl.BlockSpec(memory_space=pltpu.MemorySpace.VMEM)

    out = pl.pallas_call(
        _fused_linear_block_kernel,
        in_specs=[smem, smem] + [vmem] * 10,
        out_specs=vmem,
        out_shape=jax.ShapeDtypeStruct((n_rows, fp), jnp.float32),
        compiler_params=pltpu.CompilerParams(
            vmem_limit_bytes=min(max(est, 32 << 20), 48 << 20)),
    )(nvalid, lin["alphas"], x_pad,
      lin["bn1"], lin["bn25"],
      lin["w1"], lin["w2"], lin["w3"], lin["w4"], lin["w5"],
      lin["b14"], lin["b5"])
    return out[:n, :f]


# ----------------------------------------------------------------------------
# HSEblock forward
# ----------------------------------------------------------------------------
def hse_block_forward(x, batch, node_type_index, params):
    # TODO(synk): HHGNN is not defined in the reference source -> identity
    # layers; hyper_x[mask] == x for a sorted `batch`, and hyper_edge is only
    # consumed by HHGNN, so to_dense_batch / the dHyper matmul are bypassed.
    del batch, node_type_index
    return linear_block(x, params["lin"])


# ----------------------------------------------------------------------------
# Deterministic parameter construction (lane-padded, bf16 weights)
# ----------------------------------------------------------------------------
def xavier_uniform(key, shape):
    fan_in, fan_out = shape
    limit = (6.0 / (fan_in + fan_out)) ** 0.5
    return jax.random.uniform(key, shape, jnp.float32, -limit, limit)


def _pad2(w, rp, cp):
    return jnp.zeros((rp, cp), w.dtype).at[:w.shape[0], :w.shape[1]].set(w)


def make_params(key, hidden_dim, hyper_num):
    f, s = hidden_dim, 6 * hidden_dim
    fp, sp = _round_up(f, LANE), _round_up(s, LANE)
    keys = jax.random.split(key, 11)

    # Kept for module fidelity; consumed only by the unimplemented HHGNN path.
    d_hyper = xavier_uniform(keys[0], (f, hyper_num))

    def bn_rows(c, cp):
        g = jnp.zeros((cp,), jnp.float32).at[:c].set(1.0)   # gamma=1, padded 0
        b = jnp.zeros((cp,), jnp.float32)                   # beta=0
        return g, b

    def lin_wb(kw, kb, cin, cout, cinp, coutp):
        w = _pad2(xavier_uniform(kw, (cin, cout)), cinp, coutp).astype(jnp.bfloat16)
        b = _pad2(0.01 * jax.random.normal(kb, (1, cout), jnp.float32), 1, coutp)
        return w, b

    g1, be1 = bn_rows(f, fp)
    w1, b1 = lin_wb(keys[1], keys[2], f, s, fp, sp)
    g2, be2 = bn_rows(s, sp)
    w2, b2 = lin_wb(keys[3], keys[4], s, s, sp, sp)
    g3, be3 = bn_rows(s, sp)
    w3, b3 = lin_wb(keys[5], keys[6], s, s, sp, sp)
    g4, be4 = bn_rows(s, sp)
    w4, b4 = lin_wb(keys[7], keys[8], s, s, sp, sp)
    g5, be5 = bn_rows(s, sp)
    w5, b5 = lin_wb(keys[9], keys[10], s, f, sp, fp)

    lin = {
        "bn1": jnp.stack([g1, be1], axis=0),                              # (2, fp)
        "bn25": jnp.stack([g2, be2, g3, be3, g4, be4, g5, be5], axis=0),  # (8, sp)
        "w1": w1, "w2": w2, "w3": w3, "w4": w4, "w5": w5,                 # bf16, padded
        "b14": jnp.concatenate([b1, b2, b3, b4], axis=0),                 # (4, sp)
        "b5": b5,                                                         # (1, fp)
        "alphas": jnp.full((4,), 0.25, jnp.float32),                      # PReLU defaults
    }
    return {"d_hyper": d_hyper, "lin": lin}


if __name__ == "__main__":
    hidden_dim = 32
    hyper_num = 8
    num_node_type = 13

    key = jax.random.PRNGKey(0)
    k_x, k_p, k_t = jax.random.split(key, 3)

    # 12 nodes total: graph 0 has 5 nodes, graph 1 has 7 nodes (sorted batch).
    batch = jnp.array([0] * 5 + [1] * 7, dtype=jnp.int32)
    n = int(batch.shape[0])
    x = jax.random.normal(k_x, (n, hidden_dim), jnp.float32)
    node_type_index = jax.random.randint(k_t, (n,), 0, num_node_type)

    params = make_params(k_p, hidden_dim, hyper_num)

    out = jax.jit(hse_block_forward)(x, batch, node_type_index, params)
    jax.block_until_ready(out)
    assert out.shape == (n, hidden_dim), out.shape
    print("KERNEL_OK")
</pallas_src>

<mosaic_0001>
module attributes {stable_mosaic.version = 11 : i64} {
  func.func @_fused_linear_block_kernel(%arg0: memref<1xi32, #tpu.memory_space<smem>>, %arg1: memref<4xf32, #tpu.memory_space<smem>>, %arg2: memref<16x128xf32, #tpu.memory_space<vmem>>, %arg3: memref<2x128xf32, #tpu.memory_space<vmem>>, %arg4: memref<8x256xf32, #tpu.memory_space<vmem>>, %arg5: memref<128x256xbf16, #tpu.memory_space<vmem>>, %arg6: memref<256x256xbf16, #tpu.memory_space<vmem>>, %arg7: memref<256x256xbf16, #tpu.memory_space<vmem>>, %arg8: memref<256x256xbf16, #tpu.memory_space<vmem>>, %arg9: memref<256x128xbf16, #tpu.memory_space<vmem>>, %arg10: memref<4x256xf32, #tpu.memory_space<vmem>>, %arg11: memref<1x128xf32, #tpu.memory_space<vmem>>, %arg12: memref<16x128xf32, #tpu.memory_space<vmem>>) attributes {dimension_semantics = [], scalar_prefetch = 0 : i64, scratch_operands = 0 : i64, tpu.core_type = #tpu.core_type<tc>} {
    %c0 = arith.constant 0 : index
    %0 = memref.load %arg0[%c0] : memref<1xi32, #tpu.memory_space<smem>>
    %1 = arith.sitofp %0 : i32 to f32
    %2 = tpu.iota {dimensions = array<i32: 0>} : vector<16x1xi32>
    %3 = vector.broadcast %0 : i32 to vector<16x1xi32>
    %4 = arith.cmpi slt, %2, %3 : vector<16x1xi32>
    %5 = arith.extui %4 : vector<16x1xi1> to vector<16x1xi32>
    %6 = arith.sitofp %5 : vector<16x1xi32> to vector<16x1xf32>
    %c0_0 = arith.constant 0 : index
    %c0_1 = arith.constant 0 : index
    %7 = vector.load %arg2[%c0_0, %c0_1] : memref<16x128xf32, #tpu.memory_space<vmem>>, vector<16x128xf32>
    %c0_2 = arith.constant 0 : index
    %c0_3 = arith.constant 0 : index
    %8 = vector.load %arg3[%c0_2, %c0_3] : memref<2x128xf32, #tpu.memory_space<vmem>>, vector<1x128xf32>
    %c1 = arith.constant 1 : index
    %c0_4 = arith.constant 0 : index
    %9 = vector.load %arg3[%c1, %c0_4] : memref<2x128xf32, #tpu.memory_space<vmem>>, vector<1x128xf32>
    %c0_5 = arith.constant 0 : index
    %c0_6 = arith.constant 0 : index
    %10 = vector.load %arg10[%c0_5, %c0_6] : memref<4x256xf32, #tpu.memory_space<vmem>>, vector<1x256xf32>
    %11 = vector.broadcast %6 : vector<16x1xf32> to vector<16x128xf32>
    %12 = arith.mulf %7, %11 : vector<16x128xf32>
    %cst = arith.constant dense<0.000000e+00> : vector<128xf32>
    %13 = vector.multi_reduction <add>, %12, %cst [0] : vector<16x128xf32> to vector<128xf32>
    %14 = vector.shape_cast %13 : vector<128xf32> to vector<1x128xf32>
    %15 = vector.broadcast %1 : f32 to vector<1x128xf32>
    %16 = arith.divf %14, %15 : vector<1x128xf32>
    %17 = arith.mulf %12, %12 : vector<16x128xf32>
    %cst_7 = arith.constant dense<0.000000e+00> : vector<128xf32>
    %18 = vector.multi_reduction <add>, %17, %cst_7 [0] : vector<16x128xf32> to vector<128xf32>
    %19 = vector.shape_cast %18 : vector<128xf32> to vector<1x128xf32>
    %20 = vector.broadcast %1 : f32 to vector<1x128xf32>
    %21 = arith.divf %19, %20 : vector<1x128xf32>
    %22 = arith.mulf %16, %16 : vector<1x128xf32>
    %23 = arith.subf %21, %22 : vector<1x128xf32>
    %cst_8 = arith.constant 0.000000e+00 : f32
    %24 = vector.broadcast %cst_8 : f32 to vector<1x128xf32>
    %25 = arith.maximumf %23, %24 : vector<1x128xf32>
    %cst_9 = arith.constant 9.99999974E-6 : f32
    %26 = vector.broadcast %cst_9 : f32 to vector<1x128xf32>
    %27 = arith.addf %25, %26 : vector<1x128xf32>
    %28 = math.rsqrt %27 : vector<1x128xf32>
    %29 = arith.mulf %8, %28 : vector<1x128xf32>
    %30 = vector.broadcast %29 : vector<1x128xf32> to vector<16x128xf32>
    %31 = arith.mulf %7, %30 : vector<16x128xf32>
    %32 = arith.mulf %16, %29 : vector<1x128xf32>
    %33 = arith.subf %9, %32 : vector<1x128xf32>
    %34 = vector.broadcast %33 : vector<1x128xf32> to vector<16x128xf32>
    %35 = arith.addf %31, %34 : vector<16x128xf32>
    %36 = arith.truncf %35 : vector<16x128xf32> to vector<16x128xbf16>
    %c0_10 = arith.constant 0 : index
    %c0_11 = arith.constant 0 : index
    %37 = vector.load %arg5[%c0_10, %c0_11] : memref<128x256xbf16, #tpu.memory_space<vmem>>, vector<128x256xbf16>
    %cst_12 = arith.constant dense<0.000000e+00> : vector<16x256xf32>
    %38 = tpu.matmul %36, %37, %cst_12 {dimension_numbers = #tpu.dot_dimension_numbers<[1], [0], [0], [1], [0, 0, 1, 1], [], []>} : vector<16x128xbf16>, vector<128x256xbf16>, vector<16x256xf32> -> vector<16x256xf32>
    %39 = vector.broadcast %10 : vector<1x256xf32> to vector<16x256xf32>
    %40 = arith.addf %38, %39 : vector<16x256xf32>
    %c0_13 = arith.constant 0 : index
    %c0_14 = arith.constant 0 : index
    %41 = vector.load %arg4[%c0_13, %c0_14] : memref<8x256xf32, #tpu.memory_space<vmem>>, vector<1x256xf32>
    %c1_15 = arith.constant 1 : index
    %c0_16 = arith.constant 0 : index
    %42 = vector.load %arg4[%c1_15, %c0_16] : memref<8x256xf32, #tpu.memory_space<vmem>>, vector<1x256xf32>
    %c1_17 = arith.constant 1 : index
    %c0_18 = arith.constant 0 : index
    %43 = vector.load %arg10[%c1_17, %c0_18] : memref<4x256xf32, #tpu.memory_space<vmem>>, vector<1x256xf32>
    %c0_19 = arith.constant 0 : index
    %44 = memref.load %arg1[%c0_19] : memref<4xf32, #tpu.memory_space<smem>>
    %45 = vector.broadcast %6 : vector<16x1xf32> to vector<16x256xf32>
    %46 = arith.mulf %40, %45 : vector<16x256xf32>
    %cst_20 = arith.constant dense<0.000000e+00> : vector<256xf32>
    %47 = vector.multi_reduction <add>, %46, %cst_20 [0] : vector<16x256xf32> to vector<256xf32>
    %48 = vector.shape_cast %47 : vector<256xf32> to vector<1x256xf32>
    %49 = vector.broadcast %1 : f32 to vector<1x256xf32>
    %50 = arith.divf %48, %49 : vector<1x256xf32>
    %51 = arith.mulf %46, %46 : vector<16x256xf32>
    %cst_21 = arith.constant dense<0.000000e+00> : vector<256xf32>
    %52 = vector.multi_reduction <add>, %51, %cst_21 [0] : vector<16x256xf32> to vector<256xf32>
    %53 = vector.shape_cast %52 : vector<256xf32> to vector<1x256xf32>
    %54 = vector.broadcast %1 : f32 to vector<1x256xf32>
    %55 = arith.divf %53, %54 : vector<1x256xf32>
    %56 = arith.mulf %50, %50 : vector<1x256xf32>
    %57 = arith.subf %55, %56 : vector<1x256xf32>
    %cst_22 = arith.constant 0.000000e+00 : f32
    %58 = vector.broadcast %cst_22 : f32 to vector<1x256xf32>
    %59 = arith.maximumf %57, %58 : vector<1x256xf32>
    %cst_23 = arith.constant 9.99999974E-6 : f32
    %60 = vector.broadcast %cst_23 : f32 to vector<1x256xf32>
    %61 = arith.addf %59, %60 : vector<1x256xf32>
    %62 = math.rsqrt %61 : vector<1x256xf32>
    %63 = arith.mulf %41, %62 : vector<1x256xf32>
    %64 = vector.broadcast %63 : vector<1x256xf32> to vector<16x256xf32>
    %65 = arith.mulf %40, %64 : vector<16x256xf32>
    %66 = arith.mulf %50, %63 : vector<1x256xf32>
    %67 = arith.subf %42, %66 : vector<1x256xf32>
    %68 = vector.broadcast %67 : vector<1x256xf32> to vector<16x256xf32>
    %69 = arith.addf %65, %68 : vector<16x256xf32>
    %cst_24 = arith.constant 0.000000e+00 : f32
    %70 = vector.broadcast %cst_24 : f32 to vector<16x256xf32>
    %71 = arith.cmpf oge, %69, %70 : vector<16x256xf32>
    %72 = vector.broadcast %44 : f32 to vector<16x256xf32>
    %73 = arith.mulf %72, %69 : vector<16x256xf32>
    %74 = arith.select %71, %69, %73 : vector<16x256xi1>, vector<16x256xf32>
    %75 = arith.truncf %74 : vector<16x256xf32> to vector<16x256xbf16>
    %c0_25 = arith.constant 0 : index
    %c0_26 = arith.constant 0 : index
    %76 = vector.load %arg6[%c0_25, %c0_26] : memref<256x256xbf16, #tpu.memory_space<vmem>>, vector<256x256xbf16>
    %cst_27 = arith.constant dense<0.000000e+00> : vector<16x256xf32>
    %77 = tpu.matmul %75, %76, %cst_27 {dimension_numbers = #tpu.dot_dimension_numbers<[1], [0], [0], [1], [0, 0, 1, 1], [], []>} : vector<16x256xbf16>, vector<256x256xbf16>, vector<16x256xf32> -> vector<16x256xf32>
    %78 = vector.broadcast %43 : vector<1x256xf32> to vector<16x256xf32>
    %79 = arith.addf %77, %78 : vector<16x256xf32>
    %c2 = arith.constant 2 : index
    %c0_28 = arith.constant 0 : index
    %80 = vector.load %arg4[%c2, %c0_28] : memref<8x256xf32, #tpu.memory_space<vmem>>, vector<1x256xf32>
    %c3 = arith.constant 3 : index
    %c0_29 = arith.constant 0 : index
    %81 = vector.load %arg4[%c3, %c0_29] : memref<8x256xf32, #tpu.memory_space<vmem>>, vector<1x256xf32>
    %c2_30 = arith.constant 2 : index
    %c0_31 = arith.constant 0 : index
    %82 = vector.load %arg10[%c2_30, %c0_31] : memref<4x256xf32, #tpu.memory_space<vmem>>, vector<1x256xf32>
    %c1_32 = arith.constant 1 : index
    %83 = memref.load %arg1[%c1_32] : memref<4xf32, #tpu.memory_space<smem>>
    %84 = vector.broadcast %6 : vector<16x1xf32> to vector<16x256xf32>
    %85 = arith.mulf %79, %84 : vector<16x256xf32>
    %cst_33 = arith.constant dense<0.000000e+00> : vector<256xf32>
    %86 = vector.multi_reduction <add>, %85, %cst_33 [0] : vector<16x256xf32> to vector<256xf32>
    %87 = vector.shape_cast %86 : vector<256xf32> to vector<1x256xf32>
    %88 = vector.broadcast %1 : f32 to vector<1x256xf32>
    %89 = arith.divf %87, %88 : vector<1x256xf32>
    %90 = arith.mulf %85, %85 : vector<16x256xf32>
    %cst_34 = arith.constant dense<0.000000e+00> : vector<256xf32>
    %91 = vector.multi_reduction <add>, %90, %cst_34 [0] : vector<16x256xf32> to vector<256xf32>
    %92 = vector.shape_cast %91 : vector<256xf32> to vector<1x256xf32>
    %93 = vector.broadcast %1 : f32 to vector<1x256xf32>
    %94 = arith.divf %92, %93 : vector<1x256xf32>
    %95 = arith.mulf %89, %89 : vector<1x256xf32>
    %96 = arith.subf %94, %95 : vector<1x256xf32>
    %cst_35 = arith.constant 0.000000e+00 : f32
    %97 = vector.broadcast %cst_35 : f32 to vector<1x256xf32>
    %98 = arith.maximumf %96, %97 : vector<1x256xf32>
    %cst_36 = arith.constant 9.99999974E-6 : f32
    %99 = vector.broadcast %cst_36 : f32 to vector<1x256xf32>
    %100 = arith.addf %98, %99 : vector<1x256xf32>
    %101 = math.rsqrt %100 : vector<1x256xf32>
    %102 = arith.mulf %80, %101 : vector<1x256xf32>
    %103 = vector.broadcast %102 : vector<1x256xf32> to vector<16x256xf32>
    %104 = arith.mulf %79, %103 : vector<16x256xf32>
    %105 = arith.mulf %89, %102 : vector<1x256xf32>
    %106 = arith.subf %81, %105 : vector<1x256xf32>
    %107 = vector.broadcast %106 : vector<1x256xf32> to vector<16x256xf32>
    %108 = arith.addf %104, %107 : vector<16x256xf32>
    %cst_37 = arith.constant 0.000000e+00 : f32
    %109 = vector.broadcast %cst_37 : f32 to vector<16x256xf32>
    %110 = arith.cmpf oge, %108, %109 : vector<16x256xf32>
    %111 = vector.broadcast %83 : f32 to vector<16x256xf32>
    %112 = arith.mulf %111, %108 : vector<16x256xf32>
    %113 = arith.select %110, %108, %112 : vector<16x256xi1>, vector<16x256xf32>
    %114 = arith.truncf %113 : vector<16x256xf32> to vector<16x256xbf16>
    %c0_38 = arith.constant 0 : index
    %c0_39 = arith.constant 0 : index
    %115 = vector.load %arg7[%c0_38, %c0_39] : memref<256x256xbf16, #tpu.memory_space<vmem>>, vector<256x256xbf16>
    %cst_40 = arith.constant dense<0.000000e+00> : vector<16x256xf32>
    %116 = tpu.matmul %114, %115, %cst_40 {dimension_numbers = #tpu.dot_dimension_numbers<[1], [0], [0], [1], [0, 0, 1, 1], [], []>} : vector<16x256xbf16>, vector<256x256xbf16>, vector<16x256xf32> -> vector<16x256xf32>
    %117 = vector.broadcast %82 : vector<1x256xf32> to vector<16x256xf32>
    %118 = arith.addf %116, %117 : vector<16x256xf32>
    %119 = arith.addf %118, %40 : vector<16x256xf32>
    %cst_41 = arith.constant 5.000000e-01 : f32
    %120 = vector.broadcast %cst_41 : f32 to vector<16x256xf32>
    %121 = arith.mulf %119, %120 : vector<16x256xf32>
    %c4 = arith.constant 4 : index
    %c0_42 = arith.constant 0 : index
    %122 = vector.load %arg4[%c4, %c0_42] : memref<8x256xf32, #tpu.memory_space<vmem>>, vector<1x256xf32>
    %c5 = arith.constant 5 : index
    %c0_43 = arith.constant 0 : index
    %123 = vector.load %arg4[%c5, %c0_43] : memref<8x256xf32, #tpu.memory_space<vmem>>, vector<1x256xf32>
    %c3_44 = arith.constant 3 : index
    %c0_45 = arith.constant 0 : index
    %124 = vector.load %arg10[%c3_44, %c0_45] : memref<4x256xf32, #tpu.memory_space<vmem>>, vector<1x256xf32>
    %c2_46 = arith.constant 2 : index
    %125 = memref.load %arg1[%c2_46] : memref<4xf32, #tpu.memory_space<smem>>
    %126 = vector.broadcast %6 : vector<16x1xf32> to vector<16x256xf32>
    %127 = arith.mulf %121, %126 : vector<16x256xf32>
    %cst_47 = arith.constant dense<0.000000e+00> : vector<256xf32>
    %128 = vector.multi_reduction <add>, %127, %cst_47 [0] : vector<16x256xf32> to vector<256xf32>
    %129 = vector.shape_cast %128 : vector<256xf32> to vector<1x256xf32>
    %130 = vector.broadcast %1 : f32 to vector<1x256xf32>
    %131 = arith.divf %129, %130 : vector<1x256xf32>
    %132 = arith.mulf %127, %127 : vector<16x256xf32>
    %cst_48 = arith.constant dense<0.000000e+00> : vector<256xf32>
    %133 = vector.multi_reduction <add>, %132, %cst_48 [0] : vector<16x256xf32> to vector<256xf32>
    %134 = vector.shape_cast %133 : vector<256xf32> to vector<1x256xf32>
    %135 = vector.broadcast %1 : f32 to vector<1x256xf32>
    %136 = arith.divf %134, %135 : vector<1x256xf32>
    %137 = arith.mulf %131, %131 : vector<1x256xf32>
    %138 = arith.subf %136, %137 : vector<1x256xf32>
    %cst_49 = arith.constant 0.000000e+00 : f32
    %139 = vector.broadcast %cst_49 : f32 to vector<1x256xf32>
    %140 = arith.maximumf %138, %139 : vector<1x256xf32>
    %cst_50 = arith.constant 9.99999974E-6 : f32
    %141 = vector.broadcast %cst_50 : f32 to vector<1x256xf32>
    %142 = arith.addf %140, %141 : vector<1x256xf32>
    %143 = math.rsqrt %142 : vector<1x256xf32>
    %144 = arith.mulf %122, %143 : vector<1x256xf32>
    %145 = vector.broadcast %144 : vector<1x256xf32> to vector<16x256xf32>
    %146 = arith.mulf %121, %145 : vector<16x256xf32>
    %147 = arith.mulf %131, %144 : vector<1x256xf32>
    %148 = arith.subf %123, %147 : vector<1x256xf32>
    %149 = vector.broadcast %148 : vector<1x256xf32> to vector<16x256xf32>
    %150 = arith.addf %146, %149 : vector<16x256xf32>
    %cst_51 = arith.constant 0.000000e+00 : f32
    %151 = vector.broadcast %cst_51 : f32 to vector<16x256xf32>
    %152 = arith.cmpf oge, %150, %151 : vector<16x256xf32>
    %153 = vector.broadcast %125 : f32 to vector<16x256xf32>
    %154 = arith.mulf %153, %150 : vector<16x256xf32>
    %155 = arith.select %152, %150, %154 : vector<16x256xi1>, vector<16x256xf32>
    %156 = arith.truncf %155 : vector<16x256xf32> to vector<16x256xbf16>
    %c0_52 = arith.constant 0 : index
    %c0_53 = arith.constant 0 : index
    %157 = vector.load %arg8[%c0_52, %c0_53] : memref<256x256xbf16, #tpu.memory_space<vmem>>, vector<256x256xbf16>
    %cst_54 = arith.constant dense<0.000000e+00> : vector<16x256xf32>
    %158 = tpu.matmul %156, %157, %cst_54 {dimension_numbers = #tpu.dot_dimension_numbers<[1], [0], [0], [1], [0, 0, 1, 1], [], []>} : vector<16x256xbf16>, vector<256x256xbf16>, vector<16x256xf32> -> vector<16x256xf32>
    %159 = vector.broadcast %124 : vector<1x256xf32> to vector<16x256xf32>
    %160 = arith.addf %158, %159 : vector<16x256xf32>
    %161 = arith.addf %160, %121 : vector<16x256xf32>
    %cst_55 = arith.constant 5.000000e-01 : f32
    %162 = vector.broadcast %cst_55 : f32 to vector<16x256xf32>
    %163 = arith.mulf %161, %162 : vector<16x256xf32>
    %c6 = arith.constant 6 : index
    %c0_56 = arith.constant 0 : index
    %164 = vector.load %arg4[%c6, %c0_56] : memref<8x256xf32, #tpu.memory_space<vmem>>, vector<1x256xf32>
    %c7 = arith.constant 7 : index
    %c0_57 = arith.constant 0 : index
    %165 = vector.load %arg4[%c7, %c0_57] : memref<8x256xf32, #tpu.memory_space<vmem>>, vector<1x256xf32>
    %c0_58 = arith.constant 0 : index
    %c0_59 = arith.constant 0 : index
    %166 = vector.load %arg11[%c0_58, %c0_59] : memref<1x128xf32, #tpu.memory_space<vmem>>, vector<1x128xf32>
    %c3_60 = arith.constant 3 : index
    %167 = memref.load %arg1[%c3_60] : memref<4xf32, #tpu.memory_space<smem>>
    %168 = vector.broadcast %6 : vector<16x1xf32> to vector<16x256xf32>
    %169 = arith.mulf %163, %168 : vector<16x256xf32>
    %cst_61 = arith.constant dense<0.000000e+00> : vector<256xf32>
    %170 = vector.multi_reduction <add>, %169, %cst_61 [0] : vector<16x256xf32> to vector<256xf32>
    %171 = vector.shape_cast %170 : vector<256xf32> to vector<1x256xf32>
    %172 = vector.broadcast %1 : f32 to vector<1x256xf32>
    %173 = arith.divf %171, %172 : vector<1x256xf32>
    %174 = arith.mulf %169, %169 : vector<16x256xf32>
    %cst_62 = arith.constant dense<0.000000e+00> : vector<256xf32>
    %175 = vector.multi_reduction <add>, %174, %cst_62 [0] : vector<16x256xf32> to vector<256xf32>
    %176 = vector.shape_cast %175 : vector<256xf32> to vector<1x256xf32>
    %177 = vector.broadcast %1 : f32 to vector<1x256xf32>
    %178 = arith.divf %176, %177 : vector<1x256xf32>
    %179 = arith.mulf %173, %173 : vector<1x256xf32>
    %180 = arith.subf %178, %179 : vector<1x256xf32>
    %cst_63 = arith.constant 0.000000e+00 : f32
    %181 = vector.broadcast %cst_63 : f32 to vector<1x256xf32>
    %182 = arith.maximumf %180, %181 : vector<1x256xf32>
    %cst_64 = arith.constant 9.99999974E-6 : f32
    %183 = vector.broadcast %cst_64 : f32 to vector<1x256xf32>
    %184 = arith.addf %182, %183 : vector<1x256xf32>
    %185 = math.rsqrt %184 : vector<1x256xf32>
    %186 = arith.mulf %164, %185 : vector<1x256xf32>
    %187 = vector.broadcast %186 : vector<1x256xf32> to vector<16x256xf32>
    %188 = arith.mulf %163, %187 : vector<16x256xf32>
    %189 = arith.mulf %173, %186 : vector<1x256xf32>
    %190 = arith.subf %165, %189 : vector<1x256xf32>
    %191 = vector.broadcast %190 : vector<1x256xf32> to vector<16x256xf32>
    %192 = arith.addf %188, %191 : vector<16x256xf32>
    %cst_65 = arith.constant 0.000000e+00 : f32
    %193 = vector.broadcast %cst_65 : f32 to vector<16x256xf32>
    %194 = arith.cmpf oge, %192, %193 : vector<16x256xf32>
    %195 = vector.broadcast %167 : f32 to vector<16x256xf32>
    %196 = arith.mulf %195, %192 : vector<16x256xf32>
    %197 = arith.select %194, %192, %196 : vector<16x256xi1>, vector<16x256xf32>
    %198 = arith.truncf %197 : vector<16x256xf32> to vector<16x256xbf16>
    %c0_66 = arith.constant 0 : index
    %c0_67 = arith.constant 0 : index
    %199 = vector.load %arg9[%c0_66, %c0_67] : memref<256x128xbf16, #tpu.memory_space<vmem>>, vector<256x128xbf16>
    %cst_68 = arith.constant dense<0.000000e+00> : vector<16x128xf32>
    %200 = tpu.matmul %198, %199, %cst_68 {dimension_numbers = #tpu.dot_dimension_numbers<[1], [0], [0], [1], [0, 0, 1, 1], [], []>} : vector<16x256xbf16>, vector<256x128xbf16>, vector<16x128xf32> -> vector<16x128xf32>
    %201 = vector.broadcast %166 : vector<1x128xf32> to vector<16x128xf32>
    %202 = arith.addf %200, %201 : vector<16x128xf32>
    %c0_69 = arith.constant 0 : index
    %c0_70 = arith.constant 0 : index
    %203 = vector.load %arg12[%c0_69, %c0_70] : memref<16x128xf32, #tpu.memory_space<vmem>>, vector<16x128xf32>
    tpu.vector_store %arg12[%c0_69, %c0_70], %202 {strides = array<i32>} : memref<16x128xf32, #tpu.memory_space<vmem>>, vector<16x128xf32>,
    return
  }
}

</mosaic_0001>

<llo_original>
// kernel: hse_block_forward.1
$region0: #{hse_block_forward.1}
  #allocation0 [shape = 'u32[]', space=smem, size = 0x4, offset = 0x4, fixed_abs, tag = 'smem constant byte address 0x4 - core index']
  #allocation1 [shape = 'u32[144,128]{1,0:T(1,128)}', space=vmem, size = 0x12000, scoped, tag = 'internal scratch']
  #allocation2 [shape = 's32[1]{0:T(128)S(6)}', space=smem, size = 0x200, scoped, tag = 'scoped memory for hse_block_forward.1']
  %s0 = inlined_call_operand.<no memory space> [shape: s32[1], index: 0, kind: input, shape index: {}]
  %s1 = inlined_call_operand.vmem [shape: f32[4], index: 1, kind: input, shape index: {}]
  %s2 = inlined_call_operand.vmem [shape: f32[16,128], index: 2, kind: input, shape index: {}]
  %s3 = inlined_call_operand.vmem [shape: f32[2,128], index: 3, kind: input, shape index: {}]
  %s4 = inlined_call_operand.vmem [shape: f32[8,256], index: 4, kind: input, shape index: {}]
  %s5 = inlined_call_operand.hbm [shape: bf16[128,256], index: 5, kind: input, shape index: {}]
  %s6 = inlined_call_operand.hbm [shape: bf16[256,256], index: 6, kind: input, shape index: {}]
  %s7 = inlined_call_operand.hbm [shape: bf16[256,256], index: 7, kind: input, shape index: {}]
  %s8 = inlined_call_operand.hbm [shape: bf16[256,256], index: 8, kind: input, shape index: {}]
  %s9 = inlined_call_operand.hbm [shape: bf16[256,128], index: 9, kind: input, shape index: {}]
  %s10 = inlined_call_operand.vmem [shape: f32[4,256], index: 10, kind: input, shape index: {}]
  %s11 = inlined_call_operand.vmem [shape: f32[1,128], index: 11, kind: input, shape index: {}]
  %s12 = inlined_call_operand.hbm [shape: f32[16,128], index: 12, kind: output, shape index: {}]
  %s13 = sld [smem:[#allocation0]]
  $region82: #{hse_block_forward.1} parent=0
    _
  %s15 = ssub.s32 1, %s13
  %s16 = scalar_select 0, %s15, %s13
  %17 = sst [smem:[#allocation2]] %s0
  $region1: #{hse_block_forward.1} parent=0
    #allocation3 [shape = 'u8[512]{0}', space=smem, size = 0x200, scoped, tag = 'input window, operand 1, single buffered']
    #allocation4 [shape = 's32[1]{0}', space=sflag, size = 0x4, scoped, tag = 'scoped memory for hse_block_forward.1']
    #allocation5 [shape = 's32[1]{0}', space=sflag, size = 0x4, scoped, tag = 'scoped memory for hse_block_forward.1']
    #allocation6 [shape = 's32[1]{0}', space=sflag, size = 0x4, scoped, tag = 'scoped memory for hse_block_forward.1']
    #allocation7 [shape = 'u8[65536]{0}', space=vmem, size = 0x10000, scoped, tag = 'input window, operand 5, single buffered']
    #allocation8 [shape = 'u8[131072]{0}', space=vmem, size = 0x20000, scoped, tag = 'input window, operand 6, single buffered']
    #allocation9 [shape = 's32[1]{0}', space=sflag, size = 0x4, scoped, tag = 'scoped memory for hse_block_forward.1']
    #allocation10 [shape = 'u8[131072]{0}', space=vmem, size = 0x20000, scoped, tag = 'input window, operand 7, single buffered']
    #allocation11 [shape = 'u8[131072]{0}', space=vmem, size = 0x20000, scoped, tag = 'input window, operand 8, single buffered']
    #allocation12 [shape = 's32[1]{0}', space=sflag, size = 0x4, scoped, tag = 'scoped memory for hse_block_forward.1']
    #allocation13 [shape = 'u8[65536]{0}', space=vmem, size = 0x10000, scoped, tag = 'input window, operand 9, single buffered']
    #allocation14 [shape = 'u8[8192]{0}', space=vmem, size = 0x2000, scoped, tag = 'output window, operand 0, single buffered']
    %18 = vsyncpa [#allocation6], 0
    %19 = vsyncpa [#allocation4], 0
    %20 = vsyncpa [#allocation9], 0
    %21 = vsyncpa [#allocation12], 0
    %22 = vsyncpa [#allocation5], 0
    // Predicated region
    $region2: #{hse_block_forward.1} parent=1 // pred_check
      _
    $region3: #{hse_block_forward.1} parent=1 // pred_check_branch
      %24 = sbr.rel (0) target = $region5
    $region4: #{hse_block_forward.1} parent=1 // pred_region
      _
    $region5: #{hse_block_forward.1} parent=1 // pred_fallthru
      _
    // Predicated region
    $region6: #{hse_block_forward.1} parent=1 // pred_check
      _
    $region7: #{hse_block_forward.1} parent=1 // pred_check_branch
      %26 = sbr.rel (0) target = $region9
    $region8: #{hse_block_forward.1} parent=1 // pred_region
      %s28 = ssub.s32 16, 16
      %29 = vsyncadd [#allocation6], %s28
      %s31 = sshll.u32 %s1, 4
      %s32 = int_to_ptr.vmem [resolvable:$true] %s31
      %34 = dma.vmem_to_smem %s32, 16, [#allocation3], [#allocation6]
    $region9: #{hse_block_forward.1} parent=1 // pred_fallthru
      _
    // Predicated region
    $region10: #{hse_block_forward.1} parent=1 // pred_check
      _
    $region11: #{hse_block_forward.1} parent=1 // pred_check_branch
      %36 = sbr.rel (0) target = $region13
    $region12: #{hse_block_forward.1} parent=1 // pred_region
      _
    $region13: #{hse_block_forward.1} parent=1 // pred_fallthru
      _
    // Predicated region
    $region14: #{hse_block_forward.1} parent=1 // pred_check
      _
    $region15: #{hse_block_forward.1} parent=1 // pred_check_branch
      %38 = sbr.rel (0) target = $region17
    $region16: #{hse_block_forward.1} parent=1 // pred_region
      _
    $region17: #{hse_block_forward.1} parent=1 // pred_fallthru
      _
    // Predicated region
    $region18: #{hse_block_forward.1} parent=1 // pred_check
      _
    $region19: #{hse_block_forward.1} parent=1 // pred_check_branch
      %40 = sbr.rel (0) target = $region21
    $region20: #{hse_block_forward.1} parent=1 // pred_region
      _
    $region21: #{hse_block_forward.1} parent=1 // pred_fallthru
      _
    // Predicated region
    $region22: #{hse_block_forward.1} parent=1 // pred_check
      _
    $region23: #{hse_block_forward.1} parent=1 // pred_check_branch
      %42 = sbr.rel (0) target = $region25
    $region24: #{hse_block_forward.1} parent=1 // pred_region
      %s44 = ssub.s32 2048, 2048
      %45 = vsyncadd [#allocation4], %s44
      %s46 = sshll.u32 [#allocation7], 4
      %s47 = int_to_ptr.vmem [resolvable:$true] %s46
      %52 = dma.hbm_to_vmem [thread:$0]  %s5, 2048, %s47, [#allocation4], 128, 128, 8
    $region25: #{hse_block_forward.1} parent=1 // pred_fallthru
      _
    // Predicated region
    $region26: #{hse_block_forward.1} parent=1 // pred_check
      _
    $region27: #{hse_block_forward.1} parent=1 // pred_check_branch
      %54 = sbr.rel (0) target = $region29
    $region28: #{hse_block_forward.1} parent=1 // pred_region
      %s56 = ssub.s32 4096, 4096
      %57 = vsyncadd [#allocation9], %s56
      %s58 = sshll.u32 [#allocation8], 4
      %s59 = int_to_ptr.vmem [resolvable:$true] %s58
      %64 = dma.hbm_to_vmem [thread:$0]  %s6, 4096, %s59, [#allocation9], 128, 128, 8
    $region29: #{hse_block_forward.1} parent=1 // pred_fallthru
      _
    // Predicated region
    $region30: #{hse_block_forward.1} parent=1 // pred_check
      _
    $region31: #{hse_block_forward.1} parent=1 // pred_check_branch
      %66 = sbr.rel (0) target = $region33
    $region32: #{hse_block_forward.1} parent=1 // pred_region
      %s68 = ssub.s32 4096, 4096
      %69 = vsyncadd [#allocation9], %s68
      %s70 = sshll.u32 [#allocation10], 4
      %s71 = int_to_ptr.vmem [resolvable:$true] %s70
      %76 = dma.hbm_to_vmem [thread:$0]  %s7, 4096, %s71, [#allocation9], 128, 128, 8
    $region33: #{hse_block_forward.1} parent=1 // pred_fallthru
      _
    // Predicated region
    $region34: #{hse_block_forward.1} parent=1 // pred_check
      _
    $region35: #{hse_block_forward.1} parent=1 // pred_check_branch
      %78 = sbr.rel (0) target = $region37
    $region36: #{hse_block_forward.1} parent=1 // pred_region
      %s80 = ssub.s32 4096, 4096
      %81 = vsyncadd [#allocation12], %s80
      %s82 = sshll.u32 [#allocation11], 4
      %s83 = int_to_ptr.vmem [resolvable:$true] %s82
      %88 = dma.hbm_to_vmem [thread:$0]  %s8, 4096, %s83, [#allocation12], 128, 128, 8
    $region37: #{hse_block_forward.1} parent=1 // pred_fallthru
      _
    // Predicated region
    $region38: #{hse_block_forward.1} parent=1 // pred_check
      _
    $region39: #{hse_block_forward.1} parent=1 // pred_check_branch
      %90 = sbr.rel (0) target = $region41
    $region40: #{hse_block_forward.1} parent=1 // pred_region
      %s92 = ssub.s32 2048, 2048
      %93 = vsyncadd [#allocation12], %s92
      %s94 = sshll.u32 [#allocation13], 4
      %s95 = int_to_ptr.vmem [resolvable:$true] %s94
      %100 = dma.hbm_to_vmem [thread:$0]  %s9, 2048, %s95, [#allocation12], 64, 64, 4
    $region41: #{hse_block_forward.1} parent=1 // pred_fallthru
      _
    // Predicated region
    $region42: #{hse_block_forward.1} parent=1 // pred_check
      _
    $region43: #{hse_block_forward.1} parent=1 // pred_check_branch
      %102 = sbr.rel (0) target = $region45
    $region44: #{hse_block_forward.1} parent=1 // pred_region
      _
    $region45: #{hse_block_forward.1} parent=1 // pred_fallthru
      _
    // Predicated region
    $region46: #{hse_block_forward.1} parent=1 // pred_check
      _
    $region47: #{hse_block_forward.1} parent=1 // pred_check_branch
      %104 = sbr.rel (0) target = $region49
    $region48: #{hse_block_forward.1} parent=1 // pred_region
      _
    $region49: #{hse_block_forward.1} parent=1 // pred_fallthru
      _
    // Predicated region
    $region50: #{hse_block_forward.1} parent=1 // pred_check
      _
    $region51: #{hse_block_forward.1} parent=1 // pred_check_branch
      %106 = sbr.rel (0) target = $region53
    $region52: #{hse_block_forward.1} parent=1 // pred_region
      %107 = dma.done [#allocation6], 16
    $region53: #{hse_block_forward.1} parent=1 // pred_fallthru
      _
    // Predicated region
    $region54: #{hse_block_forward.1} parent=1 // pred_check
      _
    $region55: #{hse_block_forward.1} parent=1 // pred_check_branch
      %109 = sbr.rel (0) target = $region57
    $region56: #{hse_block_forward.1} parent=1 // pred_region
      %110 = dma.done [#allocation4], 2048
    $region57: #{hse_block_forward.1} parent=1 // pred_fallthru
      _
    // Predicated region
    $region58: #{hse_block_forward.1} parent=1 // pred_check
      _
    $region59: #{hse_block_forward.1} parent=1 // pred_check_branch
      %112 = sbr.rel (0) target = $region61
    $region60: #{hse_block_forward.1} parent=1 // pred_region
      %113 = dma.done [#allocation9], 4096
    $region61: #{hse_block_forward.1} parent=1 // pred_fallthru
      _
    // Predicated region
    $region62: #{hse_block_forward.1} parent=1 // pred_check
      _
    $region63: #{hse_block_forward.1} parent=1 // pred_check_branch
      %115 = sbr.rel (0) target = $region65
    $region64: #{hse_block_forward.1} parent=1 // pred_region
      %116 = dma.done [#allocation9], 4096
    $region65: #{hse_block_forward.1} parent=1 // pred_fallthru
      _
    // Predicated region
    $region66: #{hse_block_forward.1} parent=1 // pred_check
      _
    $region67: #{hse_block_forward.1} parent=1 // pred_check_branch
      %118 = sbr.rel (0) target = $region69
    $region68: #{hse_block_forward.1} parent=1 // pred_region
      %119 = dma.done [#allocation12], 4096
    $region69: #{hse_block_forward.1} parent=1 // pred_fallthru
      _
    // Predicated region
    $region70: #{hse_block_forward.1} parent=1 // pred_check
      _
    $region71: #{hse_block_forward.1} parent=1 // pred_check_branch
      %121 = sbr.rel (0) target = $region73
    $region72: #{hse_block_forward.1} parent=1 // pred_region
      %122 = dma.done [#allocation12], 2048
    $region73: #{hse_block_forward.1} parent=1 // pred_fallthru
      _
    %123 = sfence
    %s125 = sld [smem:[#allocation2]]
    %s126 = scvt.s32.f32 %s125
    %v127 = vlaneseq
    %v128 = vshrl.u32 %v127, 7
    %v129 = vadd.s32 %v128, 8
    %v130 = vstv %s125
    %vm131 = vcmp.lt.s32.totalorder %v128, %v130
    %vm132 = vcmp.lt.s32.totalorder %v129, %v130
    %v133 = vsel %vm131, 1, 0
    %v134 = vsel %vm132, 1, 0
    %v135 = vcvt.s32.f32 %v133
    %v136 = vcvt.s32.f32 %v134
    %v137 = vld [vmem:[%s2] sm:$0xff]
    %v138 = vld [vmem:[%s2 + $0x8] sm:$0xff]
    %v139 = vld [vmem:[%s3] sm:$0x1]
    %v140 = vld [vmem:[%s3 + $0x1] sm:$0x1]
    %v141 = vld [vmem:[%s10] ss:$4 sm:$0x3]
    %v142 = vmul.f32 %v137, %v135
    %v143 = vmul.f32 %v138, %v136
    %v144 = vadd.f32 %v142, %v143
    %v145 = vrot.slane %v144, 4
    %v146 = vadd.f32 %v144, %v145
    %v147 = vrot.slane %v146, 2
    %v148 = vadd.f32 %v146, %v147
    %v149 = vrot.slane %v148, 1
    %v150 = vadd.f32 %v148, %v149
    %v151 = vstv %s126
    %v152 = vrcp.pop %v151
    %v153 = vmul.f32 %v150, %v152
    %v154 = vmul.f32 %v142, %v142
    %v155 = vmul.f32 %v143, %v143
    %v156 = vadd.f32 %v154, %v155
    %v157 = vrot.slane %v156, 4
    %v158 = vadd.f32 %v156, %v157
    %v159 = vrot.slane %v158, 2
    %v160 = vadd.f32 %v158, %v159
    %v161 = vrot.slane %v160, 1
    %v162 = vadd.f32 %v160, %v161
    %v163 = vmul.f32 %v162, %v152
    %v164 = vmul.f32 %v153, %v153
    %v165 = vsub.f32 %v163, %v164
    %v166 = vmax.f32 %v165, 0.0
    %v167 = vadd.f32 %v166, 1e-05
    %v168 = vrsqrt.pop %v167
    %v169 = vmul.f32 %v139, %v168
    %v170 = vlaneseq
    %v171 = vshrl.u32 %v170, 7
    %v172 = vsub.s32 0, %v171
    %v173 = vrot.slane %v169, %v172
    %v174 = vmul.f32 %v137, %v173
    %v175 = vmul.f32 %v138, %v173
    %v176 = vmul.f32 %v153, %v169
    %v177 = vsub.f32 %v140, %v176
    %v178 = vlaneseq
    %v179 = vshrl.u32 %v178, 7
    %v180 = vsub.s32 0, %v179
    %v181 = vrot.slane %v177, %v180
    %v182 = vadd.f32 %v174, %v181
    %v183 = vadd.f32 %v175, %v181
    %v184 = vpack.c.bf16 %v183, %v182
    %v185 = vld [vmem:[#allocation7] sm:$0xff]
    %v186 = vld [vmem:[#allocation7 + $0x8] sm:$0xff]
    %v187 = vld [vmem:[#allocation7 + $0x10] sm:$0xff]
    %v188 = vld [vmem:[#allocation7 + $0x18] sm:$0xff]
    %v189 = vld [vmem:[#allocation7 + $0x20] sm:$0xff]
    %v190 = vld [vmem:[#allocation7 + $0x28] sm:$0xff]
    %v191 = vld [vmem:[#allocation7 + $0x30] sm:$0xff]
    %v192 = vld [vmem:[#allocation7 + $0x38] sm:$0xff]
    %v193 = vld [vmem:[#allocation7 + $0x40] sm:$0xff]
    %v194 = vld [vmem:[#allocation7 + $0x48] sm:$0xff]
    %v195 = vld [vmem:[#allocation7 + $0x50] sm:$0xff]
    %v196 = vld [vmem:[#allocation7 + $0x58] sm:$0xff]
    %v197 = vld [vmem:[#allocation7 + $0x60] sm:$0xff]
    %v198 = vld [vmem:[#allocation7 + $0x68] sm:$0xff]
    %v199 = vld [vmem:[#allocation7 + $0x70] sm:$0xff]
    %v200 = vld [vmem:[#allocation7 + $0x78] sm:$0xff]
    %v202 = vlaneseq
    %v203 = vshrl.u32 %v202, 7
    %v204 = vsub.s32 0, %v203
    %v205 = vrot.slane %v141, %v204
    %v206 = vlaneseq
    %v207 = vshrl.u32 %v206, 7
    %v208 = vsub.s32 1, %v207
    %v209 = vrot.slane %v141, %v208
    %v228 = vunpack.c.l.b16 %v185
    %v229 = vunpack.c.h.b16 %v185
    %v230 = vunpack.c.l.b16 %v186
    %v231 = vunpack.c.h.b16 %v186
    %v232 = vunpack.c.l.b16 %v187
    %v233 = vunpack.c.h.b16 %v187
    %v234 = vunpack.c.l.b16 %v188
    %v235 = vunpack.c.h.b16 %v188
    %v236 = vunpack.c.l.b16 %v189
    %v237 = vunpack.c.h.b16 %v189
    %v238 = vunpack.c.l.b16 %v190
    %v239 = vunpack.c.h.b16 %v190
    %v240 = vunpack.c.l.b16 %v191
    %v241 = vunpack.c.h.b16 %v191
    %v242 = vunpack.c.l.b16 %v192
    %v243 = vunpack.c.h.b16 %v192
    %v244 = vunpack.c.l.b16 %v193
    %v245 = vunpack.c.h.b16 %v193
    %v246 = vunpack.c.l.b16 %v194
    %v247 = vunpack.c.h.b16 %v194
    %v248 = vunpack.c.l.b16 %v195
    %v249 = vunpack.c.h.b16 %v195
    %v250 = vunpack.c.l.b16 %v196
    %v251 = vunpack.c.h.b16 %v196
    %v252 = vunpack.c.l.b16 %v197
    %v253 = vunpack.c.h.b16 %v197
    %v254 = vunpack.c.l.b16 %v198
    %v255 = vunpack.c.h.b16 %v198
    %v256 = vunpack.c.l.b16 %v199
    %v257 = vunpack.c.h.b16 %v199
    %v258 = vunpack.c.l.b16 %v200
    %v259 = vunpack.c.h.b16 %v200
    %v260 = vpack.c.b16 %v230, %v228
    %v261 = vpack.c.b16 %v231, %v229
    %v262 = vpack.c.b16 %v234, %v232
    %v263 = vpack.c.b16 %v235, %v233
    %v264 = vpack.c.b16 %v238, %v236
    %v265 = vpack.c.b16 %v239, %v237
    %v266 = vpack.c.b16 %v242, %v240
    %v267 = vpack.c.b16 %v243, %v241
    %v268 = vpack.c.b16 %v246, %v244
    %v269 = vpack.c.b16 %v247, %v245
    %v270 = vpack.c.b16 %v250, %v248
    %v271 = vpack.c.b16 %v251, %v249
    %v272 = vpack.c.b16 %v254, %v252
    %v273 = vpack.c.b16 %v255, %v253
    %v274 = vpack.c.b16 %v258, %v256
    %v275 = vpack.c.b16 %v259, %v257
    %292 = vmatprep.subr.bf16.mxu0 %v261
    %293 = vmatpush1.bf16.msra.mxu0 %v260
    %294 = vmatprep.subr.bf16.mxu0 %v263
    %295 = vmatpush1.bf16.msra.mxu0 %v262
    %296 = vmatprep.subr.bf16.mxu0 %v265
    %297 = vmatpush1.bf16.msra.mxu0 %v264
    %298 = vmatprep.subr.bf16.mxu0 %v267
    %299 = vmatpush1.bf16.msra.mxu0 %v266
    %300 = vmatprep.subr.bf16.mxu0 %v269
    %301 = vmatpush1.bf16.msra.mxu0 %v268
    %302 = vmatprep.subr.bf16.mxu0 %v271
    %303 = vmatpush1.bf16.msra.mxu0 %v270
    %304 = vmatprep.subr.bf16.mxu0 %v273
    %305 = vmatpush1.bf16.msra.mxu0 %v272
    %306 = vmatprep.subr.bf16.mxu0 %v275
    %307 = vmatpush1.bf16.msra.mxu0 %v274
    %308 = vmatprep.subr.bf16.mxu0 0
    %309 = vmatpush1.bf16.msra.mxu0 0
    %310 = vmatprep.subr.bf16.mxu0 0
    %311 = vmatpush1.bf16.msra.mxu0 0
    %312 = vmatprep.subr.bf16.mxu0 0
    %313 = vmatpush1.bf16.msra.mxu0 0
    %314 = vmatprep.subr.bf16.mxu0 0
    %315 = vmatpush1.bf16.msra.mxu0 0
    %316 = vmatprep.subr.bf16.mxu0 0
    %317 = vmatpush1.bf16.msra.mxu0 0
    %318 = vmatprep.subr.bf16.mxu0 0
    %319 = vmatpush1.bf16.msra.mxu0 0
    %320 = vmatprep.subr.bf16.mxu0 0
    %321 = vmatpush1.bf16.msra.mxu0 0
    %322 = vmatprep.subr.bf16.mxu0 0
    %323 = vmatpush1.bf16.msra.mxu0 0
    %324 = vmatprep.mubr.bf16.mxu0 0
    %325 = vmatmul.mubr.bf16.gmra.mrb[0].mxu0 %v184
    %v326 = vpop.f32.mrb[0].mxu0
    %v327 = vadd.f32 %v205, %v326
    %v328 = vpop.f32.mrb[0].mxu0
    %v329 = vadd.f32 %v209, %v328
    %v330 = vpop.f32.mrb[0].mxu0
    %v331 = vadd.f32 %v205, %v330
    %v332 = vpop.f32.mrb[0].mxu0
    %v333 = vadd.f32 %v209, %v332
    %334 = vdwg.mxu0
    %v335 = vld [vmem:[%s4] ss:$8 sm:$0x3]
    %s336 = scalar_lea.vmem %s4, 1
    %v337 = vld [vmem:[%s336] ss:$8 sm:$0x3]
    %s338 = scalar_lea.vmem %s10, 1
    %v339 = vld [vmem:[%s338] ss:$4 sm:$0x3]
    %s340 = sld [smem:[#allocation3]]
    %v341 = vmul.f32 %v327, %v135
    %v342 = vmul.f32 %v329, %v135
    %v343 = vmul.f32 %v331, %v136
    %v344 = vmul.f32 %v333, %v136
    %v345 = vadd.f32 %v341, %v343
    %v346 = vrot.slane %v345, 4
    %v347 = vadd.f32 %v345, %v346
    %v348 = vrot.slane %v347, 2
    %v349 = vadd.f32 %v347, %v348
    %v350 = vrot.slane %v349, 1
    %v351 = vadd.f32 %v349, %v350
    %v352 = vadd.f32 %v342, %v344
    %v353 = vrot.slane %v352, 4
    %v354 = vadd.f32 %v352, %v353
    %v355 = vrot.slane %v354, 2
    %v356 = vadd.f32 %v354, %v355
    %v357 = vrot.slane %v356, 1
    %v358 = vadd.f32 %v356, %v357
    %v359 = vmul.f32 %v351, %v152
    %v360 = vmul.f32 %v358, %v152
    %v361 = vmul.f32 %v341, %v341
    %v362 = vmul.f32 %v342, %v342
    %v363 = vmul.f32 %v343, %v343
    %v364 = vmul.f32 %v344, %v344
    %v365 = vadd.f32 %v361, %v363
    %v366 = vrot.slane %v365, 4
    %v367 = vadd.f32 %v365, %v366
    %v368 = vrot.slane %v367, 2
    %v369 = vadd.f32 %v367, %v368
    %v370 = vrot.slane %v369, 1
    %v371 = vadd.f32 %v369, %v370
    %v372 = vadd.f32 %v362, %v364
    %v373 = vrot.slane %v372, 4
    %v374 = vadd.f32 %v372, %v373
    %v375 = vrot.slane %v374, 2
    %v376 = vadd.f32 %v374, %v375
    %v377 = vrot.slane %v376, 1
    %v378 = vadd.f32 %v376, %v377
    %v379 = vmul.f32 %v371, %v152
    %v380 = vmul.f32 %v378, %v152
    %v381 = vmul.f32 %v359, %v359
    %v382 = vmul.f32 %v360, %v360
    %v383 = vsub.f32 %v379, %v381
    %v384 = vsub.f32 %v380, %v382
    %v385 = vmax.f32 %v383, 0.0
    %v386 = vmax.f32 %v384, 0.0
    %v387 = vadd.f32 %v385, 1e-05
    %v388 = vadd.f32 %v386, 1e-05
    %v389 = vrsqrt.pop %v387
    %v390 = vrsqrt.pop %v388
    %v393 = vcombine.low %v389, %v390
    %v395 = vunpack.c.l.s4 1966171168
    %v396 = vunpack.c.0.s8 %v395
    %v397 = vlaneseq
    %v398 = vshrl.u32 %v397, 7
    %v399 = vsub.s32 %v396, %v398
    %v400 = vrot.slane %v393, %v399
    %v402 = vunpack.c.l.s4 1966171168
    %v403 = vunpack.c.0.s8 %v402
    %v404 = vlaneseq
    %v405 = vshrl.u32 %v404, 7
    %v406 = vsub.s32 %v403, %v405
    %v407 = vrot.slane %v400, %v406
    %v409 = vmul.f32 %v335, %v407
    %v411 = vlaneseq
    %v412 = vshrl.u32 %v411, 7
    %v413 = vsub.s32 0, %v412
    %v414 = vrot.slane %v409, %v413
    %v415 = vlaneseq
    %v416 = vshrl.u32 %v415, 7
    %v417 = vsub.s32 1, %v416
    %v418 = vrot.slane %v409, %v417
    %v421 = vmul.f32 %v327, %v414
    %v422 = vmul.f32 %v329, %v418
    %v423 = vmul.f32 %v331, %v414
    %v424 = vmul.f32 %v333, %v418
    %v425 = vmul.f32 %v359, %v414
    %v426 = vmul.f32 %v360, %v418
    %v429 = vcombine.low %v425, %v426
    %v431 = vunpack.c.l.s4 1966171168
    %v432 = vunpack.c.0.s8 %v431
    %v433 = vlaneseq
    %v434 = vshrl.u32 %v433, 7
    %v435 = vsub.s32 %v432, %v434
    %v436 = vrot.slane %v429, %v435
    %v438 = vunpack.c.l.s4 1966171168
    %v439 = vunpack.c.0.s8 %v438
    %v440 = vlaneseq
    %v441 = vshrl.u32 %v440, 7
    %v442 = vsub.s32 %v439, %v441
    %v443 = vrot.slane %v436, %v442
    %v445 = vsub.f32 %v337, %v443
    %v447 = vlaneseq
    %v448 = vshrl.u32 %v447, 7
    %v449 = vsub.s32 0, %v448
    %v450 = vrot.slane %v445, %v449
    %v451 = vlaneseq
    %v452 = vshrl.u32 %v451, 7
    %v453 = vsub.s32 1, %v452
    %v454 = vrot.slane %v445, %v453
    %v457 = vadd.f32 %v421, %v450
    %v458 = vadd.f32 %v422, %v454
    %v459 = vadd.f32 %v423, %v450
    %v460 = vadd.f32 %v424, %v454
    %vm461 = vcmp.ge.f32.partialorder %v457, 0.0
    %vm462 = vcmp.ge.f32.partialorder %v458, 0.0
    %vm463 = vcmp.ge.f32.partialorder %v459, 0.0
    %vm464 = vcmp.ge.f32.partialorder %v460, 0.0
    %v465 = vstv %s340
    %v466 = vmul.f32 %v465, %v457
    %v467 = vmul.f32 %v465, %v458
    %v468 = vmul.f32 %v465, %v459
    %v469 = vmul.f32 %v465, %v460
    %v470 = vsel %vm461, %v457, %v466
    %v471 = vsel %vm462, %v458, %v467
    %v472 = vsel %vm463, %v459, %v468
    %v473 = vsel %vm464, %v460, %v469
    %v474 = vpack.c.bf16 %v472, %v470
    %v475 = vpack.c.bf16 %v473, %v471
    %v476 = vld [vmem:[#allocation8] sm:$0xff]
    %v477 = vld [vmem:[#allocation8 + $0x8] sm:$0xff]
    %v478 = vld [vmem:[#allocation8 + $0x10] sm:$0xff]
    %v479 = vld [vmem:[#allocation8 + $0x18] sm:$0xff]
    %v480 = vld [vmem:[#allocation8 + $0x20] sm:$0xff]
    %v481 = vld [vmem:[#allocation8 + $0x28] sm:$0xff]
    %v482 = vld [vmem:[#allocation8 + $0x30] sm:$0xff]
    %v483 = vld [vmem:[#allocation8 + $0x38] sm:$0xff]
    %v484 = vld [vmem:[#allocation8 + $0x40] sm:$0xff]
    %v485 = vld [vmem:[#allocation8 + $0x48] sm:$0xff]
    %v486 = vld [vmem:[#allocation8 + $0x50] sm:$0xff]
    %v487 = vld [vmem:[#allocation8 + $0x58] sm:$0xff]
    %v488 = vld [vmem:[#allocation8 + $0x60] sm:$0xff]
    %v489 = vld [vmem:[#allocation8 + $0x68] sm:$0xff]
    %v490 = vld [vmem:[#allocation8 + $0x70] sm:$0xff]
    %v491 = vld [vmem:[#allocation8 + $0x78] sm:$0xff]
    %v492 = vld [vmem:[#allocation8 + $0x80] sm:$0xff]
    %v493 = vld [vmem:[#allocation8 + $0x88] sm:$0xff]
    %v494 = vld [vmem:[#allocation8 + $0x90] sm:$0xff]
    %v495 = vld [vmem:[#allocation8 + $0x98] sm:$0xff]
    %v496 = vld [vmem:[#allocation8 + $0xa0] sm:$0xff]
    %v497 = vld [vmem:[#allocation8 + $0xa8] sm:$0xff]
    %v498 = vld [vmem:[#allocation8 + $0xb0] sm:$0xff]
    %v499 = vld [vmem:[#allocation8 + $0xb8] sm:$0xff]
    %v500 = vld [vmem:[#allocation8 + $0xc0] sm:$0xff]
    %v501 = vld [vmem:[#allocation8 + $0xc8] sm:$0xff]
    %v502 = vld [vmem:[#allocation8 + $0xd0] sm:$0xff]
    %v503 = vld [vmem:[#allocation8 + $0xd8] sm:$0xff]
    %v504 = vld [vmem:[#allocation8 + $0xe0] sm:$0xff]
    %v505 = vld [vmem:[#allocation8 + $0xe8] sm:$0xff]
    %v506 = vld [vmem:[#allocation8 + $0xf0] sm:$0xff]
    %v507 = vld [vmem:[#allocation8 + $0xf8] sm:$0xff]
    %v509 = vlaneseq
    %v510 = vshrl.u32 %v509, 7
    %v511 = vsub.s32 0, %v510
    %v512 = vrot.slane %v339, %v511
    %v513 = vlaneseq
    %v514 = vshrl.u32 %v513, 7
    %v515 = vsub.s32 1, %v514
    %v516 = vrot.slane %v339, %v515
    %v551 = vunpack.c.l.b16 %v476
    %v552 = vunpack.c.h.b16 %v476
    %v553 = vunpack.c.l.b16 %v477
    %v554 = vunpack.c.h.b16 %v477
    %v555 = vunpack.c.l.b16 %v478
    %v556 = vunpack.c.h.b16 %v478
    %v557 = vunpack.c.l.b16 %v479
    %v558 = vunpack.c.h.b16 %v479
    %v559 = vunpack.c.l.b16 %v480
    %v560 = vunpack.c.h.b16 %v480
    %v561 = vunpack.c.l.b16 %v481
    %v562 = vunpack.c.h.b16 %v481
    %v563 = vunpack.c.l.b16 %v482
    %v564 = vunpack.c.h.b16 %v482
    %v565 = vunpack.c.l.b16 %v483
    %v566 = vunpack.c.h.b16 %v483
    %v567 = vunpack.c.l.b16 %v484
    %v568 = vunpack.c.h.b16 %v484
    %v569 = vunpack.c.l.b16 %v485
    %v570 = vunpack.c.h.b16 %v485
    %v571 = vunpack.c.l.b16 %v486
    %v572 = vunpack.c.h.b16 %v486
    %v573 = vunpack.c.l.b16 %v487
    %v574 = vunpack.c.h.b16 %v487
    %v575 = vunpack.c.l.b16 %v488
    %v576 = vunpack.c.h.b16 %v488
    %v577 = vunpack.c.l.b16 %v489
    %v578 = vunpack.c.h.b16 %v489
    %v579 = vunpack.c.l.b16 %v490
    %v580 = vunpack.c.h.b16 %v490
    %v581 = vunpack.c.l.b16 %v491
    %v582 = vunpack.c.h.b16 %v491
    %v583 = vunpack.c.l.b16 %v492
    %v584 = vunpack.c.h.b16 %v492
    %v585 = vunpack.c.l.b16 %v493
    %v586 = vunpack.c.h.b16 %v493
    %v587 = vunpack.c.l.b16 %v494
    %v588 = vunpack.c.h.b16 %v494
    %v589 = vunpack.c.l.b16 %v495
    %v590 = vunpack.c.h.b16 %v495
    %v591 = vunpack.c.l.b16 %v496
    %v592 = vunpack.c.h.b16 %v496
    %v593 = vunpack.c.l.b16 %v497
    %v594 = vunpack.c.h.b16 %v497
    %v595 = vunpack.c.l.b16 %v498
    %v596 = vunpack.c.h.b16 %v498
    %v597 = vunpack.c.l.b16 %v499
    %v598 = vunpack.c.h.b16 %v499
    %v599 = vunpack.c.l.b16 %v500
    %v600 = vunpack.c.h.b16 %v500
    %v601 = vunpack.c.l.b16 %v501
    %v602 = vunpack.c.h.b16 %v501
    %v603 = vunpack.c.l.b16 %v502
    %v604 = vunpack.c.h.b16 %v502
    %v605 = vunpack.c.l.b16 %v503
    %v606 = vunpack.c.h.b16 %v503
    %v607 = vunpack.c.l.b16 %v504
    %v608 = vunpack.c.h.b16 %v504
    %v609 = vunpack.c.l.b16 %v505
    %v610 = vunpack.c.h.b16 %v505
    %v611 = vunpack.c.l.b16 %v506
    %v612 = vunpack.c.h.b16 %v506
    %v613 = vunpack.c.l.b16 %v507
    %v614 = vunpack.c.h.b16 %v507
    %v615 = vpack.c.b16 %v553, %v551
    %v616 = vpack.c.b16 %v554, %v552
    %v617 = vpack.c.b16 %v557, %v555
    %v618 = vpack.c.b16 %v558, %v556
    %v619 = vpack.c.b16 %v561, %v559
    %v620 = vpack.c.b16 %v562, %v560
    %v621 = vpack.c.b16 %v565, %v563
    %v622 = vpack.c.b16 %v566, %v564
    %v623 = vpack.c.b16 %v569, %v567
    %v624 = vpack.c.b16 %v570, %v568
    %v625 = vpack.c.b16 %v573, %v571
    %v626 = vpack.c.b16 %v574, %v572
    %v627 = vpack.c.b16 %v577, %v575
    %v628 = vpack.c.b16 %v578, %v576
    %v629 = vpack.c.b16 %v581, %v579
    %v630 = vpack.c.b16 %v582, %v580
    %v631 = vpack.c.b16 %v585, %v583
    %v632 = vpack.c.b16 %v586, %v584
    %v633 = vpack.c.b16 %v589, %v587
    %v634 = vpack.c.b16 %v590, %v588
    %v635 = vpack.c.b16 %v593, %v591
    %v636 = vpack.c.b16 %v594, %v592
    %v637 = vpack.c.b16 %v597, %v595
    %v638 = vpack.c.b16 %v598, %v596
    %v639 = vpack.c.b16 %v601, %v599
    %v640 = vpack.c.b16 %v602, %v600
    %v641 = vpack.c.b16 %v605, %v603
    %v642 = vpack.c.b16 %v606, %v604
    %v643 = vpack.c.b16 %v609, %v607
    %v644 = vpack.c.b16 %v610, %v608
    %v645 = vpack.c.b16 %v613, %v611
    %v646 = vpack.c.b16 %v614, %v612
    %679 = vmatprep.subr.bf16.mxu0 %v616
    %680 = vmatpush1.bf16.msra.mxu0 %v615
    %681 = vmatprep.subr.bf16.mxu0 %v618
    %682 = vmatpush1.bf16.msra.mxu0 %v617
    %683 = vmatprep.subr.bf16.mxu0 %v620
    %684 = vmatpush1.bf16.msra.mxu0 %v619
    %685 = vmatprep.subr.bf16.mxu0 %v622
    %686 = vmatpush1.bf16.msra.mxu0 %v621
    %687 = vmatprep.subr.bf16.mxu0 %v624
    %688 = vmatpush1.bf16.msra.mxu0 %v623
    %689 = vmatprep.subr.bf16.mxu0 %v626
    %690 = vmatpush1.bf16.msra.mxu0 %v625
    %691 = vmatprep.subr.bf16.mxu0 %v628
    %692 = vmatpush1.bf16.msra.mxu0 %v627
    %693 = vmatprep.subr.bf16.mxu0 %v630
    %694 = vmatpush1.bf16.msra.mxu0 %v629
    %695 = vmatprep.subr.bf16.mxu0 %v632
    %696 = vmatpush1.bf16.msra.mxu0 %v631
    %697 = vmatprep.subr.bf16.mxu0 %v634
    %698 = vmatpush1.bf16.msra.mxu0 %v633
    %699 = vmatprep.subr.bf16.mxu0 %v636
    %700 = vmatpush1.bf16.msra.mxu0 %v635
    %701 = vmatprep.subr.bf16.mxu0 %v638
    %702 = vmatpush1.bf16.msra.mxu0 %v637
    %703 = vmatprep.subr.bf16.mxu0 %v640
    %704 = vmatpush1.bf16.msra.mxu0 %v639
    %705 = vmatprep.subr.bf16.mxu0 %v642
    %706 = vmatpush1.bf16.msra.mxu0 %v641
    %707 = vmatprep.subr.bf16.mxu0 %v644
    %708 = vmatpush1.bf16.msra.mxu0 %v643
    %709 = vmatprep.subr.bf16.mxu0 %v646
    %710 = vmatpush1.bf16.msra.mxu0 %v645
    %711 = vmatprep.mubr.bf16.mxu0 %v475
    %712 = vmatmul.mubr.bf16.gmra.mrb[0].mxu0 %v474
    %v713 = vpop.f32.mrb[0].mxu0
    %v714 = vadd.f32 %v512, %v713
    %v715 = vpop.f32.mrb[0].mxu0
    %v716 = vadd.f32 %v516, %v715
    %v717 = vpop.f32.mrb[0].mxu0
    %v718 = vadd.f32 %v512, %v717
    %v719 = vpop.f32.mrb[0].mxu0
    %v720 = vadd.f32 %v516, %v719
    %721 = vdwg.mxu0
    %s722 = scalar_lea.vmem %s4, 2
    %v723 = vld [vmem:[%s722] ss:$8 sm:$0x3]
    %s724 = scalar_lea.vmem %s4, 3
    %v725 = vld [vmem:[%s724] ss:$8 sm:$0x3]
    %s726 = scalar_lea.vmem %s10, 2
    %v727 = vld [vmem:[%s726] ss:$4 sm:$0x3]
    %s728 = sld [smem:[#allocation3 + $0x1]]
    %v729 = vmul.f32 %v714, %v135
    %v730 = vmul.f32 %v716, %v135
    %v731 = vmul.f32 %v718, %v136
    %v732 = vmul.f32 %v720, %v136
    %v733 = vadd.f32 %v729, %v731
    %v734 = vrot.slane %v733, 4
    %v735 = vadd.f32 %v733, %v734
    %v736 = vrot.slane %v735, 2
    %v737 = vadd.f32 %v735, %v736
    %v738 = vrot.slane %v737, 1
    %v739 = vadd.f32 %v737, %v738
    %v740 = vadd.f32 %v730, %v732
    %v741 = vrot.slane %v740, 4
    %v742 = vadd.f32 %v740, %v741
    %v743 = vrot.slane %v742, 2
    %v744 = vadd.f32 %v742, %v743
    %v745 = vrot.slane %v744, 1
    %v746 = vadd.f32 %v744, %v745
    %v747 = vmul.f32 %v739, %v152
    %v748 = vmul.f32 %v746, %v152
    %v749 = vmul.f32 %v729, %v729
    %v750 = vmul.f32 %v730, %v730
    %v751 = vmul.f32 %v731, %v731
    %v752 = vmul.f32 %v732, %v732
    %v753 = vadd.f32 %v749, %v751
    %v754 = vrot.slane %v753, 4
    %v755 = vadd.f32 %v753, %v754
    %v756 = vrot.slane %v755, 2
    %v757 = vadd.f32 %v755, %v756
    %v758 = vrot.slane %v757, 1
    %v759 = vadd.f32 %v757, %v758
    %v760 = vadd.f32 %v750, %v752
    %v761 = vrot.slane %v760, 4
    %v762 = vadd.f32 %v760, %v761
    %v763 = vrot.slane %v762, 2
    %v764 = vadd.f32 %v762, %v763
    %v765 = vrot.slane %v764, 1
    %v766 = vadd.f32 %v764, %v765
    %v767 = vmul.f32 %v759, %v152
    %v768 = vmul.f32 %v766, %v152
    %v769 = vmul.f32 %v747, %v747
    %v770 = vmul.f32 %v748, %v748
    %v771 = vsub.f32 %v767, %v769
    %v772 = vsub.f32 %v768, %v770
    %v773 = vmax.f32 %v771, 0.0
    %v774 = vmax.f32 %v772, 0.0
    %v775 = vadd.f32 %v773, 1e-05
    %v776 = vadd.f32 %v774, 1e-05
    %v777 = vrsqrt.pop %v775
    %v778 = vrsqrt.pop %v776
    %v781 = vcombine.low %v777, %v778
    %v783 = vunpack.c.l.s4 1966171168
    %v784 = vunpack.c.0.s8 %v783
    %v785 = vlaneseq
    %v786 = vshrl.u32 %v785, 7
    %v787 = vsub.s32 %v784, %v786
    %v788 = vrot.slane %v781, %v787
    %v790 = vunpack.c.l.s4 1966171168
    %v791 = vunpack.c.0.s8 %v790
    %v792 = vlaneseq
    %v793 = vshrl.u32 %v792, 7
    %v794 = vsub.s32 %v791, %v793
    %v795 = vrot.slane %v788, %v794
    %v797 = vmul.f32 %v723, %v795
    %v799 = vlaneseq
    %v800 = vshrl.u32 %v799, 7
    %v801 = vsub.s32 0, %v800
    %v802 = vrot.slane %v797, %v801
    %v803 = vlaneseq
    %v804 = vshrl.u32 %v803, 7
    %v805 = vsub.s32 1, %v804
    %v806 = vrot.slane %v797, %v805
    %v809 = vmul.f32 %v714, %v802
    %v810 = vmul.f32 %v716, %v806
    %v811 = vmul.f32 %v718, %v802
    %v812 = vmul.f32 %v720, %v806
    %v813 = vmul.f32 %v747, %v802
    %v814 = vmul.f32 %v748, %v806
    %v817 = vcombine.low %v813, %v814
    %v819 = vunpack.c.l.s4 1966171168
    %v820 = vunpack.c.0.s8 %v819
    %v821 = vlaneseq
    %v822 = vshrl.u32 %v821, 7
    %v823 = vsub.s32 %v820, %v822
    %v824 = vrot.slane %v817, %v823
    %v826 = vunpack.c.l.s4 1966171168
    %v827 = vunpack.c.0.s8 %v826
    %v828 = vlaneseq
    %v829 = vshrl.u32 %v828, 7
    %v830 = vsub.s32 %v827, %v829
    %v831 = vrot.slane %v824, %v830
    %v833 = vsub.f32 %v725, %v831
    %v835 = vlaneseq
    %v836 = vshrl.u32 %v835, 7
    %v837 = vsub.s32 0, %v836
    %v838 = vrot.slane %v833, %v837
    %v839 = vlaneseq
    %v840 = vshrl.u32 %v839, 7
    %v841 = vsub.s32 1, %v840
    %v842 = vrot.slane %v833, %v841
    %v845 = vadd.f32 %v809, %v838
    %v846 = vadd.f32 %v810, %v842
    %v847 = vadd.f32 %v811, %v838
    %v848 = vadd.f32 %v812, %v842
    %vm849 = vcmp.ge.f32.partialorder %v845, 0.0
    %vm850 = vcmp.ge.f32.partialorder %v846, 0.0
    %vm851 = vcmp.ge.f32.partialorder %v847, 0.0
    %vm852 = vcmp.ge.f32.partialorder %v848, 0.0
    %v853 = vstv %s728
    %v854 = vmul.f32 %v853, %v845
    %v855 = vmul.f32 %v853, %v846
    %v856 = vmul.f32 %v853, %v847
    %v857 = vmul.f32 %v853, %v848
    %v858 = vsel %vm849, %v845, %v854
    %v859 = vsel %vm850, %v846, %v855
    %v860 = vsel %vm851, %v847, %v856
    %v861 = vsel %vm852, %v848, %v857
    %v862 = vpack.c.bf16 %v860, %v858
    %v863 = vpack.c.bf16 %v861, %v859
    %v864 = vld [vmem:[#allocation10] sm:$0xff]
    %v865 = vld [vmem:[#allocation10 + $0x8] sm:$0xff]
    %v866 = vld [vmem:[#allocation10 + $0x10] sm:$0xff]
    %v867 = vld [vmem:[#allocation10 + $0x18] sm:$0xff]
    %v868 = vld [vmem:[#allocation10 + $0x20] sm:$0xff]
    %v869 = vld [vmem:[#allocation10 + $0x28] sm:$0xff]
    %v870 = vld [vmem:[#allocation10 + $0x30] sm:$0xff]
    %v871 = vld [vmem:[#allocation10 + $0x38] sm:$0xff]
    %v872 = vld [vmem:[#allocation10 + $0x40] sm:$0xff]
    %v873 = vld [vmem:[#allocation10 + $0x48] sm:$0xff]
    %v874 = vld [vmem:[#allocation10 + $0x50] sm:$0xff]
    %v875 = vld [vmem:[#allocation10 + $0x58] sm:$0xff]
    %v876 = vld [vmem:[#allocation10 + $0x60] sm:$0xff]
    %v877 = vld [vmem:[#allocation10 + $0x68] sm:$0xff]
    %v878 = vld [vmem:[#allocation10 + $0x70] sm:$0xff]
    %v879 = vld [vmem:[#allocation10 + $0x78] sm:$0xff]
    %v880 = vld [vmem:[#allocation10 + $0x80] sm:$0xff]
    %v881 = vld [vmem:[#allocation10 + $0x88] sm:$0xff]
    %v882 = vld [vmem:[#allocation10 + $0x90] sm:$0xff]
    %v883 = vld [vmem:[#allocation10 + $0x98] sm:$0xff]
    %v884 = vld [vmem:[#allocation10 + $0xa0] sm:$0xff]
    %v885 = vld [vmem:[#allocation10 + $0xa8] sm:$0xff]
    %v886 = vld [vmem:[#allocation10 + $0xb0] sm:$0xff]
    %v887 = vld [vmem:[#allocation10 + $0xb8] sm:$0xff]
    %v888 = vld [vmem:[#allocation10 + $0xc0] sm:$0xff]
    %v889 = vld [vmem:[#allocation10 + $0xc8] sm:$0xff]
    %v890 = vld [vmem:[#allocation10 + $0xd0] sm:$0xff]
    %v891 = vld [vmem:[#allocation10 + $0xd8] sm:$0xff]
    %v892 = vld [vmem:[#allocation10 + $0xe0] sm:$0xff]
    %v893 = vld [vmem:[#allocation10 + $0xe8] sm:$0xff]
    %v894 = vld [vmem:[#allocation10 + $0xf0] sm:$0xff]
    %v895 = vld [vmem:[#allocation10 + $0xf8] sm:$0xff]
    %v897 = vlaneseq
    %v898 = vshrl.u32 %v897, 7
    %v899 = vsub.s32 0, %v898
    %v900 = vrot.slane %v727, %v899
    %v901 = vlaneseq
    %v902 = vshrl.u32 %v901, 7
    %v903 = vsub.s32 1, %v902
    %v904 = vrot.slane %v727, %v903
    %v939 = vunpack.c.l.b16 %v864
    %v940 = vunpack.c.h.b16 %v864
    %v941 = vunpack.c.l.b16 %v865
    %v942 = vunpack.c.h.b16 %v865
    %v943 = vunpack.c.l.b16 %v866
    %v944 = vunpack.c.h.b16 %v866
    %v945 = vunpack.c.l.b16 %v867
    %v946 = vunpack.c.h.b16 %v867
    %v947 = vunpack.c.l.b16 %v868
    %v948 = vunpack.c.h.b16 %v868
    %v949 = vunpack.c.l.b16 %v869
    %v950 = vunpack.c.h.b16 %v869
    %v951 = vunpack.c.l.b16 %v870
    %v952 = vunpack.c.h.b16 %v870
    %v953 = vunpack.c.l.b16 %v871
    %v954 = vunpack.c.h.b16 %v871
    %v955 = vunpack.c.l.b16 %v872
    %v956 = vunpack.c.h.b16 %v872
    %v957 = vunpack.c.l.b16 %v873
    %v958 = vunpack.c.h.b16 %v873
    %v959 = vunpack.c.l.b16 %v874
    %v960 = vunpack.c.h.b16 %v874
    %v961 = vunpack.c.l.b16 %v875
    %v962 = vunpack.c.h.b16 %v875
    %v963 = vunpack.c.l.b16 %v876
    %v964 = vunpack.c.h.b16 %v876
    %v965 = vunpack.c.l.b16 %v877
    %v966 = vunpack.c.h.b16 %v877
    %v967 = vunpack.c.l.b16 %v878
    %v968 = vunpack.c.h.b16 %v878
    %v969 = vunpack.c.l.b16 %v879
    %v970 = vunpack.c.h.b16 %v879
    %v971 = vunpack.c.l.b16 %v880
    %v972 = vunpack.c.h.b16 %v880
    %v973 = vunpack.c.l.b16 %v881
    %v974 = vunpack.c.h.b16 %v881
    %v975 = vunpack.c.l.b16 %v882
    %v976 = vunpack.c.h.b16 %v882
    %v977 = vunpack.c.l.b16 %v883
    %v978 = vunpack.c.h.b16 %v883
    %v979 = vunpack.c.l.b16 %v884
    %v980 = vunpack.c.h.b16 %v884
    %v981 = vunpack.c.l.b16 %v885
    %v982 = vunpack.c.h.b16 %v885
    %v983 = vunpack.c.l.b16 %v886
    %v984 = vunpack.c.h.b16 %v886
    %v985 = vunpack.c.l.b16 %v887
    %v986 = vunpack.c.h.b16 %v887
    %v987 = vunpack.c.l.b16 %v888
    %v988 = vunpack.c.h.b16 %v888
    %v989 = vunpack.c.l.b16 %v889
    %v990 = vunpack.c.h.b16 %v889
    %v991 = vunpack.c.l.b16 %v890
    %v992 = vunpack.c.h.b16 %v890
    %v993 = vunpack.c.l.b16 %v891
    %v994 = vunpack.c.h.b16 %v891
    %v995 = vunpack.c.l.b16 %v892
    %v996 = vunpack.c.h.b16 %v892
    %v997 = vunpack.c.l.b16 %v893
    %v998 = vunpack.c.h.b16 %v893
    %v999 = vunpack.c.l.b16 %v894
    %v1000 = vunpack.c.h.b16 %v894
    %v1001 = vunpack.c.l.b16 %v895
    %v1002 = vunpack.c.h.b16 %v895
    %v1003 = vpack.c.b16 %v941, %v939
    %v1004 = vpack.c.b16 %v942, %v940
    %v1005 = vpack.c.b16 %v945, %v943
    %v1006 = vpack.c.b16 %v946, %v944
    %v1007 = vpack.c.b16 %v949, %v947
    %v1008 = vpack.c.b16 %v950, %v948
    %v1009 = vpack.c.b16 %v953, %v951
    %v1010 = vpack.c.b16 %v954, %v952
    %v1011 = vpack.c.b16 %v957, %v955
    %v1012 = vpack.c.b16 %v958, %v956
    %v1013 = vpack.c.b16 %v961, %v959
    %v1014 = vpack.c.b16 %v962, %v960
    %v1015 = vpack.c.b16 %v965, %v963
    %v1016 = vpack.c.b16 %v966, %v964
    %v1017 = vpack.c.b16 %v969, %v967
    %v1018 = vpack.c.b16 %v970, %v968
    %v1019 = vpack.c.b16 %v973, %v971
    %v1020 = vpack.c.b16 %v974, %v972
    %v1021 = vpack.c.b16 %v977, %v975
    %v1022 = vpack.c.b16 %v978, %v976
    %v1023 = vpack.c.b16 %v981, %v979
    %v1024 = vpack.c.b16 %v982, %v980
    %v1025 = vpack.c.b16 %v985, %v983
    %v1026 = vpack.c.b16 %v986, %v984
    %v1027 = vpack.c.b16 %v989, %v987
    %v1028 = vpack.c.b16 %v990, %v988
    %v1029 = vpack.c.b16 %v993, %v991
    %v1030 = vpack.c.b16 %v994, %v992
    %v1031 = vpack.c.b16 %v997, %v995
    %v1032 = vpack.c.b16 %v998, %v996
    %v1033 = vpack.c.b16 %v1001, %v999
    %v1034 = vpack.c.b16 %v1002, %v1000
    %1067 = vmatprep.subr.bf16.mxu0 %v1004
    %1068 = vmatpush1.bf16.msra.mxu0 %v1003
    %1069 = vmatprep.subr.bf16.mxu0 %v1006
    %1070 = vmatpush1.bf16.msra.mxu0 %v1005
    %1071 = vmatprep.subr.bf16.mxu0 %v1008
    %1072 = vmatpush1.bf16.msra.mxu0 %v1007
    %1073 = vmatprep.subr.bf16.mxu0 %v1010
    %1074 = vmatpush1.bf16.msra.mxu0 %v1009
    %1075 = vmatprep.subr.bf16.mxu0 %v1012
    %1076 = vmatpush1.bf16.msra.mxu0 %v1011
    %1077 = vmatprep.subr.bf16.mxu0 %v1014
    %1078 = vmatpush1.bf16.msra.mxu0 %v1013
    %1079 = vmatprep.subr.bf16.mxu0 %v1016
    %1080 = vmatpush1.bf16.msra.mxu0 %v1015
    %1081 = vmatprep.subr.bf16.mxu0 %v1018
    %1082 = vmatpush1.bf16.msra.mxu0 %v1017
    %1083 = vmatprep.subr.bf16.mxu0 %v1020
    %1084 = vmatpush1.bf16.msra.mxu0 %v1019
    %1085 = vmatprep.subr.bf16.mxu0 %v1022
    %1086 = vmatpush1.bf16.msra.mxu0 %v1021
    %1087 = vmatprep.subr.bf16.mxu0 %v1024
    %1088 = vmatpush1.bf16.msra.mxu0 %v1023
    %1089 = vmatprep.subr.bf16.mxu0 %v1026
    %1090 = vmatpush1.bf16.msra.mxu0 %v1025
    %1091 = vmatprep.subr.bf16.mxu0 %v1028
    %1092 = vmatpush1.bf16.msra.mxu0 %v1027
    %1093 = vmatprep.subr.bf16.mxu0 %v1030
    %1094 = vmatpush1.bf16.msra.mxu0 %v1029
    %1095 = vmatprep.subr.bf16.mxu0 %v1032
    %1096 = vmatpush1.bf16.msra.mxu0 %v1031
    %1097 = vmatprep.subr.bf16.mxu0 %v1034
    %1098 = vmatpush1.bf16.msra.mxu0 %v1033
    %1099 = vmatprep.mubr.bf16.mxu0 %v863
    %1100 = vmatmul.mubr.bf16.gmra.mrb[0].mxu0 %v862
    %v1101 = vpop.f32.mrb[0].mxu0
    %v1102 = vadd.f32 %v900, %v1101
    %v1103 = vpop.f32.mrb[0].mxu0
    %v1104 = vadd.f32 %v904, %v1103
    %v1105 = vpop.f32.mrb[0].mxu0
    %v1106 = vadd.f32 %v900, %v1105
    %v1107 = vpop.f32.mrb[0].mxu0
    %v1108 = vadd.f32 %v904, %v1107
    %1109 = vdwg.mxu0
    %v1110 = vadd.f32 %v1102, %v327
    %v1111 = vadd.f32 %v1104, %v329
    %v1112 = vadd.f32 %v1106, %v331
    %v1113 = vadd.f32 %v1108, %v333
    %v1114 = vmul.f32 %v1110, 0.5
    %v1115 = vmul.f32 %v1111, 0.5
    %v1116 = vmul.f32 %v1112, 0.5
    %v1117 = vmul.f32 %v1113, 0.5
    %s1118 = scalar_lea.vmem %s4, 4
    %v1119 = vld [vmem:[%s1118] ss:$8 sm:$0x3]
    %s1120 = scalar_lea.vmem %s4, 5
    %v1121 = vld [vmem:[%s1120] ss:$8 sm:$0x3]
    %s1122 = scalar_lea.vmem %s10, 3
    %v1123 = vld [vmem:[%s1122] ss:$4 sm:$0x3]
    %s1124 = sld [smem:[#allocation3 + $0x2]]
    %v1125 = vmul.f32 %v1114, %v135
    %v1126 = vmul.f32 %v1115, %v135
    %v1127 = vmul.f32 %v1116, %v136
    %v1128 = vmul.f32 %v1117, %v136
    %v1129 = vadd.f32 %v1125, %v1127
    %v1130 = vrot.slane %v1129, 4
    %v1131 = vadd.f32 %v1129, %v1130
    %v1132 = vrot.slane %v1131, 2
    %v1133 = vadd.f32 %v1131, %v1132
    %v1134 = vrot.slane %v1133, 1
    %v1135 = vadd.f32 %v1133, %v1134
    %v1136 = vadd.f32 %v1126, %v1128
    %v1137 = vrot.slane %v1136, 4
    %v1138 = vadd.f32 %v1136, %v1137
    %v1139 = vrot.slane %v1138, 2
    %v1140 = vadd.f32 %v1138, %v1139
    %v1141 = vrot.slane %v1140, 1
    %v1142 = vadd.f32 %v1140, %v1141
    %v1143 = vmul.f32 %v1135, %v152
    %v1144 = vmul.f32 %v1142, %v152
    %v1145 = vmul.f32 %v1125, %v1125
    %v1146 = vmul.f32 %v1126, %v1126
    %v1147 = vmul.f32 %v1127, %v1127
    %v1148 = vmul.f32 %v1128, %v1128
    %v1149 = vadd.f32 %v1145, %v1147
    %v1150 = vrot.slane %v1149, 4
    %v1151 = vadd.f32 %v1149, %v1150
    %v1152 = vrot.slane %v1151, 2
    %v1153 = vadd.f32 %v1151, %v1152
    %v1154 = vrot.slane %v1153, 1
    %v1155 = vadd.f32 %v1153, %v1154
    %v1156 = vadd.f32 %v1146, %v1148
    %v1157 = vrot.slane %v1156, 4
    %v1158 = vadd.f32 %v1156, %v1157
    %v1159 = vrot.slane %v1158, 2
    %v1160 = vadd.f32 %v1158, %v1159
    %v1161 = vrot.slane %v1160, 1
    %v1162 = vadd.f32 %v1160, %v1161
    %v1163 = vmul.f32 %v1155, %v152
    %v1164 = vmul.f32 %v1162, %v152
    %v1165 = vmul.f32 %v1143, %v1143
    %v1166 = vmul.f32 %v1144, %v1144
    %v1167 = vsub.f32 %v1163, %v1165
    %v1168 = vsub.f32 %v1164, %v1166
    %v1169 = vmax.f32 %v1167, 0.0
    %v1170 = vmax.f32 %v1168, 0.0
    %v1171 = vadd.f32 %v1169, 1e-05
    %v1172 = vadd.f32 %v1170, 1e-05
    %v1173 = vrsqrt.pop %v1171
    %v1174 = vrsqrt.pop %v1172
    %v1177 = vcombine.low %v1173, %v1174
    %v1179 = vunpack.c.l.s4 1966171168
    %v1180 = vunpack.c.0.s8 %v1179
    %v1181 = vlaneseq
    %v1182 = vshrl.u32 %v1181, 7
    %v1183 = vsub.s32 %v1180, %v1182
    %v1184 = vrot.slane %v1177, %v1183
    %v1186 = vunpack.c.l.s4 1966171168
    %v1187 = vunpack.c.0.s8 %v1186
    %v1188 = vlaneseq
    %v1189 = vshrl.u32 %v1188, 7
    %v1190 = vsub.s32 %v1187, %v1189
    %v1191 = vrot.slane %v1184, %v1190
    %v1193 = vmul.f32 %v1119, %v1191
    %v1195 = vlaneseq
    %v1196 = vshrl.u32 %v1195, 7
    %v1197 = vsub.s32 0, %v1196
    %v1198 = vrot.slane %v1193, %v1197
    %v1199 = vlaneseq
    %v1200 = vshrl.u32 %v1199, 7
    %v1201 = vsub.s32 1, %v1200
    %v1202 = vrot.slane %v1193, %v1201
    %v1205 = vmul.f32 %v1114, %v1198
    %v1206 = vmul.f32 %v1115, %v1202
    %v1207 = vmul.f32 %v1116, %v1198
    %v1208 = vmul.f32 %v1117, %v1202
    %v1209 = vmul.f32 %v1143, %v1198
    %v1210 = vmul.f32 %v1144, %v1202
    %v1213 = vcombine.low %v1209, %v1210
    %v1215 = vunpack.c.l.s4 1966171168
    %v1216 = vunpack.c.0.s8 %v1215
    %v1217 = vlaneseq
    %v1218 = vshrl.u32 %v1217, 7
    %v1219 = vsub.s32 %v1216, %v1218
    %v1220 = vrot.slane %v1213, %v1219
    %v1222 = vunpack.c.l.s4 1966171168
    %v1223 = vunpack.c.0.s8 %v1222
    %v1224 = vlaneseq
    %v1225 = vshrl.u32 %v1224, 7
    %v1226 = vsub.s32 %v1223, %v1225
    %v1227 = vrot.slane %v1220, %v1226
    %v1229 = vsub.f32 %v1121, %v1227
    %v1231 = vlaneseq
    %v1232 = vshrl.u32 %v1231, 7
    %v1233 = vsub.s32 0, %v1232
    %v1234 = vrot.slane %v1229, %v1233
    %v1235 = vlaneseq
    %v1236 = vshrl.u32 %v1235, 7
    %v1237 = vsub.s32 1, %v1236
    %v1238 = vrot.slane %v1229, %v1237
    %v1241 = vadd.f32 %v1205, %v1234
    %v1242 = vadd.f32 %v1206, %v1238
    %v1243 = vadd.f32 %v1207, %v1234
    %v1244 = vadd.f32 %v1208, %v1238
    %vm1245 = vcmp.ge.f32.partialorder %v1241, 0.0
    %vm1246 = vcmp.ge.f32.partialorder %v1242, 0.0
    %vm1247 = vcmp.ge.f32.partialorder %v1243, 0.0
    %vm1248 = vcmp.ge.f32.partialorder %v1244, 0.0
    %v1249 = vstv %s1124
    %v1250 = vmul.f32 %v1249, %v1241
    %v1251 = vmul.f32 %v1249, %v1242
    %v1252 = vmul.f32 %v1249, %v1243
    %v1253 = vmul.f32 %v1249, %v1244
    %v1254 = vsel %vm1245, %v1241, %v1250
    %v1255 = vsel %vm1246, %v1242, %v1251
    %v1256 = vsel %vm1247, %v1243, %v1252
    %v1257 = vsel %vm1248, %v1244, %v1253
    %v1258 = vpack.c.bf16 %v1256, %v1254
    %v1259 = vpack.c.bf16 %v1257, %v1255
    %v1260 = vld [vmem:[#allocation11] sm:$0xff]
    %v1261 = vld [vmem:[#allocation11 + $0x8] sm:$0xff]
    %v1262 = vld [vmem:[#allocation11 + $0x10] sm:$0xff]
    %v1263 = vld [vmem:[#allocation11 + $0x18] sm:$0xff]
    %v1264 = vld [vmem:[#allocation11 + $0x20] sm:$0xff]
    %v1265 = vld [vmem:[#allocation11 + $0x28] sm:$0xff]
    %v1266 = vld [vmem:[#allocation11 + $0x30] sm:$0xff]
    %v1267 = vld [vmem:[#allocation11 + $0x38] sm:$0xff]
    %v1268 = vld [vmem:[#allocation11 + $0x40] sm:$0xff]
    %v1269 = vld [vmem:[#allocation11 + $0x48] sm:$0xff]
    %v1270 = vld [vmem:[#allocation11 + $0x50] sm:$0xff]
    %v1271 = vld [vmem:[#allocation11 + $0x58] sm:$0xff]
    %v1272 = vld [vmem:[#allocation11 + $0x60] sm:$0xff]
    %v1273 = vld [vmem:[#allocation11 + $0x68] sm:$0xff]
    %v1274 = vld [vmem:[#allocation11 + $0x70] sm:$0xff]
    %v1275 = vld [vmem:[#allocation11 + $0x78] sm:$0xff]
    %v1276 = vld [vmem:[#allocation11 + $0x80] sm:$0xff]
    %v1277 = vld [vmem:[#allocation11 + $0x88] sm:$0xff]
    %v1278 = vld [vmem:[#allocation11 + $0x90] sm:$0xff]
    %v1279 = vld [vmem:[#allocation11 + $0x98] sm:$0xff]
    %v1280 = vld [vmem:[#allocation11 + $0xa0] sm:$0xff]
    %v1281 = vld [vmem:[#allocation11 + $0xa8] sm:$0xff]
    %v1282 = vld [vmem:[#allocation11 + $0xb0] sm:$0xff]
    %v1283 = vld [vmem:[#allocation11 + $0xb8] sm:$0xff]
    %v1284 = vld [vmem:[#allocation11 + $0xc0] sm:$0xff]
    %v1285 = vld [vmem:[#allocation11 + $0xc8] sm:$0xff]
    %v1286 = vld [vmem:[#allocation11 + $0xd0] sm:$0xff]
    %v1287 = vld [vmem:[#allocation11 + $0xd8] sm:$0xff]
    %v1288 = vld [vmem:[#allocation11 + $0xe0] sm:$0xff]
    %v1289 = vld [vmem:[#allocation11 + $0xe8] sm:$0xff]
    %v1290 = vld [vmem:[#allocation11 + $0xf0] sm:$0xff]
    %v1291 = vld [vmem:[#allocation11 + $0xf8] sm:$0xff]
    %v1293 = vlaneseq
    %v1294 = vshrl.u32 %v1293, 7
    %v1295 = vsub.s32 0, %v1294
    %v1296 = vrot.slane %v1123, %v1295
    %v1297 = vlaneseq
    %v1298 = vshrl.u32 %v1297, 7
    %v1299 = vsub.s32 1, %v1298
    %v1300 = vrot.slane %v1123, %v1299
    %v1335 = vunpack.c.l.b16 %v1260
    %v1336 = vunpack.c.h.b16 %v1260
    %v1337 = vunpack.c.l.b16 %v1261
    %v1338 = vunpack.c.h.b16 %v1261
    %v1339 = vunpack.c.l.b16 %v1262
    %v1340 = vunpack.c.h.b16 %v1262
    %v1341 = vunpack.c.l.b16 %v1263
    %v1342 = vunpack.c.h.b16 %v1263
    %v1343 = vunpack.c.l.b16 %v1264
    %v1344 = vunpack.c.h.b16 %v1264
    %v1345 = vunpack.c.l.b16 %v1265
    %v1346 = vunpack.c.h.b16 %v1265
    %v1347 = vunpack.c.l.b16 %v1266
    %v1348 = vunpack.c.h.b16 %v1266
    %v1349 = vunpack.c.l.b16 %v1267
    %v1350 = vunpack.c.h.b16 %v1267
    %v1351 = vunpack.c.l.b16 %v1268
    %v1352 = vunpack.c.h.b16 %v1268
    %v1353 = vunpack.c.l.b16 %v1269
    %v1354 = vunpack.c.h.b16 %v1269
    %v1355 = vunpack.c.l.b16 %v1270
    %v1356 = vunpack.c.h.b16 %v1270
    %v1357 = vunpack.c.l.b16 %v1271
    %v1358 = vunpack.c.h.b16 %v1271
    %v1359 = vunpack.c.l.b16 %v1272
    %v1360 = vunpack.c.h.b16 %v1272
    %v1361 = vunpack.c.l.b16 %v1273
    %v1362 = vunpack.c.h.b16 %v1273
    %v1363 = vunpack.c.l.b16 %v1274
    %v1364 = vunpack.c.h.b16 %v1274
    %v1365 = vunpack.c.l.b16 %v1275
    %v1366 = vunpack.c.h.b16 %v1275
    %v1367 = vunpack.c.l.b16 %v1276
    %v1368 = vunpack.c.h.b16 %v1276
    %v1369 = vunpack.c.l.b16 %v1277
    %v1370 = vunpack.c.h.b16 %v1277
    %v1371 = vunpack.c.l.b16 %v1278
    %v1372 = vunpack.c.h.b16 %v1278
    %v1373 = vunpack.c.l.b16 %v1279
    %v1374 = vunpack.c.h.b16 %v1279
    %v1375 = vunpack.c.l.b16 %v1280
    %v1376 = vunpack.c.h.b16 %v1280
    %v1377 = vunpack.c.l.b16 %v1281
    %v1378 = vunpack.c.h.b16 %v1281
    %v1379 = vunpack.c.l.b16 %v1282
    %v1380 = vunpack.c.h.b16 %v1282
    %v1381 = vunpack.c.l.b16 %v1283
    %v1382 = vunpack.c.h.b16 %v1283
    %v1383 = vunpack.c.l.b16 %v1284
    %v1384 = vunpack.c.h.b16 %v1284
    %v1385 = vunpack.c.l.b16 %v1285
    %v1386 = vunpack.c.h.b16 %v1285
    %v1387 = vunpack.c.l.b16 %v1286
    %v1388 = vunpack.c.h.b16 %v1286
    %v1389 = vunpack.c.l.b16 %v1287
    %v1390 = vunpack.c.h.b16 %v1287
    %v1391 = vunpack.c.l.b16 %v1288
    %v1392 = vunpack.c.h.b16 %v1288
    %v1393 = vunpack.c.l.b16 %v1289
    %v1394 = vunpack.c.h.b16 %v1289
    %v1395 = vunpack.c.l.b16 %v1290
    %v1396 = vunpack.c.h.b16 %v1290
    %v1397 = vunpack.c.l.b16 %v1291
    %v1398 = vunpack.c.h.b16 %v1291
    %v1399 = vpack.c.b16 %v1337, %v1335
    %v1400 = vpack.c.b16 %v1338, %v1336
    %v1401 = vpack.c.b16 %v1341, %v1339
    %v1402 = vpack.c.b16 %v1342, %v1340
    %v1403 = vpack.c.b16 %v1345, %v1343
    %v1404 = vpack.c.b16 %v1346, %v1344
    %v1405 = vpack.c.b16 %v1349, %v1347
    %v1406 = vpack.c.b16 %v1350, %v1348
    %v1407 = vpack.c.b16 %v1353, %v1351
    %v1408 = vpack.c.b16 %v1354, %v1352
    %v1409 = vpack.c.b16 %v1357, %v1355
    %v1410 = vpack.c.b16 %v1358, %v1356
    %v1411 = vpack.c.b16 %v1361, %v1359
    %v1412 = vpack.c.b16 %v1362, %v1360
    %v1413 = vpack.c.b16 %v1365, %v1363
    %v1414 = vpack.c.b16 %v1366, %v1364
    %v1415 = vpack.c.b16 %v1369, %v1367
    %v1416 = vpack.c.b16 %v1370, %v1368
    %v1417 = vpack.c.b16 %v1373, %v1371
    %v1418 = vpack.c.b16 %v1374, %v1372
    %v1419 = vpack.c.b16 %v1377, %v1375
    %v1420 = vpack.c.b16 %v1378, %v1376
    %v1421 = vpack.c.b16 %v1381, %v1379
    %v1422 = vpack.c.b16 %v1382, %v1380
    %v1423 = vpack.c.b16 %v1385, %v1383
    %v1424 = vpack.c.b16 %v1386, %v1384
    %v1425 = vpack.c.b16 %v1389, %v1387
    %v1426 = vpack.c.b16 %v1390, %v1388
    %v1427 = vpack.c.b16 %v1393, %v1391
    %v1428 = vpack.c.b16 %v1394, %v1392
    %v1429 = vpack.c.b16 %v1397, %v1395
    %v1430 = vpack.c.b16 %v1398, %v1396
    %1463 = vmatprep.subr.bf16.mxu0 %v1400
    %1464 = vmatpush1.bf16.msra.mxu0 %v1399
    %1465 = vmatprep.subr.bf16.mxu0 %v1402
    %1466 = vmatpush1.bf16.msra.mxu0 %v1401
    %1467 = vmatprep.subr.bf16.mxu0 %v1404
    %1468 = vmatpush1.bf16.msra.mxu0 %v1403
    %1469 = vmatprep.subr.bf16.mxu0 %v1406
    %1470 = vmatpush1.bf16.msra.mxu0 %v1405
    %1471 = vmatprep.subr.bf16.mxu0 %v1408
    %1472 = vmatpush1.bf16.msra.mxu0 %v1407
    %1473 = vmatprep.subr.bf16.mxu0 %v1410
    %1474 = vmatpush1.bf16.msra.mxu0 %v1409
    %1475 = vmatprep.subr.bf16.mxu0 %v1412
    %1476 = vmatpush1.bf16.msra.mxu0 %v1411
    %1477 = vmatprep.subr.bf16.mxu0 %v1414
    %1478 = vmatpush1.bf16.msra.mxu0 %v1413
    %1479 = vmatprep.subr.bf16.mxu0 %v1416
    %1480 = vmatpush1.bf16.msra.mxu0 %v1415
    %1481 = vmatprep.subr.bf16.mxu0 %v1418
    %1482 = vmatpush1.bf16.msra.mxu0 %v1417
    %1483 = vmatprep.subr.bf16.mxu0 %v1420
    %1484 = vmatpush1.bf16.msra.mxu0 %v1419
    %1485 = vmatprep.subr.bf16.mxu0 %v1422
    %1486 = vmatpush1.bf16.msra.mxu0 %v1421
    %1487 = vmatprep.subr.bf16.mxu0 %v1424
    %1488 = vmatpush1.bf16.msra.mxu0 %v1423
    %1489 = vmatprep.subr.bf16.mxu0 %v1426
    %1490 = vmatpush1.bf16.msra.mxu0 %v1425
    %1491 = vmatprep.subr.bf16.mxu0 %v1428
    %1492 = vmatpush1.bf16.msra.mxu0 %v1427
    %1493 = vmatprep.subr.bf16.mxu0 %v1430
    %1494 = vmatpush1.bf16.msra.mxu0 %v1429
    %1495 = vmatprep.mubr.bf16.mxu0 %v1259
    %1496 = vmatmul.mubr.bf16.gmra.mrb[0].mxu0 %v1258
    %v1497 = vpop.f32.mrb[0].mxu0
    %v1498 = vadd.f32 %v1296, %v1497
    %v1499 = vpop.f32.mrb[0].mxu0
    %v1500 = vadd.f32 %v1300, %v1499
    %v1501 = vpop.f32.mrb[0].mxu0
    %v1502 = vadd.f32 %v1296, %v1501
    %v1503 = vpop.f32.mrb[0].mxu0
    %v1504 = vadd.f32 %v1300, %v1503
    %1505 = vdwg.mxu0
    %v1506 = vadd.f32 %v1498, %v1114
    %v1507 = vadd.f32 %v1500, %v1115
    %v1508 = vadd.f32 %v1502, %v1116
    %v1509 = vadd.f32 %v1504, %v1117
    %v1510 = vmul.f32 %v1506, 0.5
    %v1511 = vmul.f32 %v1507, 0.5
    %v1512 = vmul.f32 %v1508, 0.5
    %v1513 = vmul.f32 %v1509, 0.5
    %s1514 = scalar_lea.vmem %s4, 6
    %v1515 = vld [vmem:[%s1514] ss:$8 sm:$0x3]
    %s1516 = scalar_lea.vmem %s4, 7
    %v1517 = vld [vmem:[%s1516] ss:$8 sm:$0x3]
    %v1518 = vld [vmem:[%s11] sm:$0x1]
    %s1519 = sld [smem:[#allocation3 + $0x3]]
    %v1520 = vmul.f32 %v1510, %v135
    %v1521 = vmul.f32 %v1511, %v135
    %v1522 = vmul.f32 %v1512, %v136
    %v1523 = vmul.f32 %v1513, %v136
    %v1524 = vadd.f32 %v1520, %v1522
    %v1525 = vrot.slane %v1524, 4
    %v1526 = vadd.f32 %v1524, %v1525
    %v1527 = vrot.slane %v1526, 2
    %v1528 = vadd.f32 %v1526, %v1527
    %v1529 = vrot.slane %v1528, 1
    %v1530 = vadd.f32 %v1528, %v1529
    %v1531 = vadd.f32 %v1521, %v1523
    %v1532 = vrot.slane %v1531, 4
    %v1533 = vadd.f32 %v1531, %v1532
    %v1534 = vrot.slane %v1533, 2
    %v1535 = vadd.f32 %v1533, %v1534
    %v1536 = vrot.slane %v1535, 1
    %v1537 = vadd.f32 %v1535, %v1536
    %v1538 = vmul.f32 %v1530, %v152
    %v1539 = vmul.f32 %v1537, %v152
    %v1540 = vmul.f32 %v1520, %v1520
    %v1541 = vmul.f32 %v1521, %v1521
    %v1542 = vmul.f32 %v1522, %v1522
    %v1543 = vmul.f32 %v1523, %v1523
    %v1544 = vadd.f32 %v1540, %v1542
    %v1545 = vrot.slane %v1544, 4
    %v1546 = vadd.f32 %v1544, %v1545
    %v1547 = vrot.slane %v1546, 2
    %v1548 = vadd.f32 %v1546, %v1547
    %v1549 = vrot.slane %v1548, 1
    %v1550 = vadd.f32 %v1548, %v1549
    %v1551 = vadd.f32 %v1541, %v1543
    %v1552 = vrot.slane %v1551, 4
    %v1553 = vadd.f32 %v1551, %v1552
    %v1554 = vrot.slane %v1553, 2
    %v1555 = vadd.f32 %v1553, %v1554
    %v1556 = vrot.slane %v1555, 1
    %v1557 = vadd.f32 %v1555, %v1556
    %v1558 = vmul.f32 %v1550, %v152
    %v1559 = vmul.f32 %v1557, %v152
    %v1560 = vmul.f32 %v1538, %v1538
    %v1561 = vmul.f32 %v1539, %v1539
    %v1562 = vsub.f32 %v1558, %v1560
    %v1563 = vsub.f32 %v1559, %v1561
    %v1564 = vmax.f32 %v1562, 0.0
    %v1565 = vmax.f32 %v1563, 0.0
    %v1566 = vadd.f32 %v1564, 1e-05
    %v1567 = vadd.f32 %v1565, 1e-05
    %v1568 = vrsqrt.pop %v1566
    %v1569 = vrsqrt.pop %v1567
    %v1572 = vcombine.low %v1568, %v1569
    %v1574 = vunpack.c.l.s4 1966171168
    %v1575 = vunpack.c.0.s8 %v1574
    %v1576 = vlaneseq
    %v1577 = vshrl.u32 %v1576, 7
    %v1578 = vsub.s32 %v1575, %v1577
    %v1579 = vrot.slane %v1572, %v1578
    %v1581 = vunpack.c.l.s4 1966171168
    %v1582 = vunpack.c.0.s8 %v1581
    %v1583 = vlaneseq
    %v1584 = vshrl.u32 %v1583, 7
    %v1585 = vsub.s32 %v1582, %v1584
    %v1586 = vrot.slane %v1579, %v1585
    %v1588 = vmul.f32 %v1515, %v1586
    %v1590 = vlaneseq
    %v1591 = vshrl.u32 %v1590, 7
    %v1592 = vsub.s32 0, %v1591
    %v1593 = vrot.slane %v1588, %v1592
    %v1594 = vlaneseq
    %v1595 = vshrl.u32 %v1594, 7
    %v1596 = vsub.s32 1, %v1595
    %v1597 = vrot.slane %v1588, %v1596
    %v1600 = vmul.f32 %v1510, %v1593
    %v1601 = vmul.f32 %v1511, %v1597
    %v1602 = vmul.f32 %v1512, %v1593
    %v1603 = vmul.f32 %v1513, %v1597
    %v1604 = vmul.f32 %v1538, %v1593
    %v1605 = vmul.f32 %v1539, %v1597
    %v1608 = vcombine.low %v1604, %v1605
    %v1610 = vunpack.c.l.s4 1966171168
    %v1611 = vunpack.c.0.s8 %v1610
    %v1612 = vlaneseq
    %v1613 = vshrl.u32 %v1612, 7
    %v1614 = vsub.s32 %v1611, %v1613
    %v1615 = vrot.slane %v1608, %v1614
    %v1617 = vunpack.c.l.s4 1966171168
    %v1618 = vunpack.c.0.s8 %v1617
    %v1619 = vlaneseq
    %v1620 = vshrl.u32 %v1619, 7
    %v1621 = vsub.s32 %v1618, %v1620
    %v1622 = vrot.slane %v1615, %v1621
    %v1624 = vsub.f32 %v1517, %v1622
    %v1626 = vlaneseq
    %v1627 = vshrl.u32 %v1626, 7
    %v1628 = vsub.s32 0, %v1627
    %v1629 = vrot.slane %v1624, %v1628
    %v1630 = vlaneseq
    %v1631 = vshrl.u32 %v1630, 7
    %v1632 = vsub.s32 1, %v1631
    %v1633 = vrot.slane %v1624, %v1632
    %v1636 = vadd.f32 %v1600, %v1629
    %v1637 = vadd.f32 %v1601, %v1633
    %v1638 = vadd.f32 %v1602, %v1629
    %v1639 = vadd.f32 %v1603, %v1633
    %vm1640 = vcmp.ge.f32.partialorder %v1636, 0.0
    %vm1641 = vcmp.ge.f32.partialorder %v1637, 0.0
    %vm1642 = vcmp.ge.f32.partialorder %v1638, 0.0
    %vm1643 = vcmp.ge.f32.partialorder %v1639, 0.0
    %v1644 = vstv %s1519
    %v1645 = vmul.f32 %v1644, %v1636
    %v1646 = vmul.f32 %v1644, %v1637
    %v1647 = vmul.f32 %v1644, %v1638
    %v1648 = vmul.f32 %v1644, %v1639
    %v1649 = vsel %vm1640, %v1636, %v1645
    %v1650 = vsel %vm1641, %v1637, %v1646
    %v1651 = vsel %vm1642, %v1638, %v1647
    %v1652 = vsel %vm1643, %v1639, %v1648
    %v1653 = vpack.c.bf16 %v1651, %v1649
    %v1654 = vpack.c.bf16 %v1652, %v1650
    %v1655 = vld [vmem:[#allocation13] sm:$0xf]
    %v1656 = vld [vmem:[#allocation13 + $0x4] sm:$0xf]
    %v1657 = vld [vmem:[#allocation13 + $0x8] sm:$0xf]
    %v1658 = vld [vmem:[#allocation13 + $0xc] sm:$0xf]
    %v1659 = vld [vmem:[#allocation13 + $0x10] sm:$0xf]
    %v1660 = vld [vmem:[#allocation13 + $0x14] sm:$0xf]
    %v1661 = vld [vmem:[#allocation13 + $0x18] sm:$0xf]
    %v1662 = vld [vmem:[#allocation13 + $0x1c] sm:$0xf]
    %v1663 = vld [vmem:[#allocation13 + $0x20] sm:$0xf]
    %v1664 = vld [vmem:[#allocation13 + $0x24] sm:$0xf]
    %v1665 = vld [vmem:[#allocation13 + $0x28] sm:$0xf]
    %v1666 = vld [vmem:[#allocation13 + $0x2c] sm:$0xf]
    %v1667 = vld [vmem:[#allocation13 + $0x30] sm:$0xf]
    %v1668 = vld [vmem:[#allocation13 + $0x34] sm:$0xf]
    %v1669 = vld [vmem:[#allocation13 + $0x38] sm:$0xf]
    %v1670 = vld [vmem:[#allocation13 + $0x3c] sm:$0xf]
    %v1671 = vld [vmem:[#allocation13 + $0x40] sm:$0xf]
    %v1672 = vld [vmem:[#allocation13 + $0x44] sm:$0xf]
    %v1673 = vld [vmem:[#allocation13 + $0x48] sm:$0xf]
    %v1674 = vld [vmem:[#allocation13 + $0x4c] sm:$0xf]
    %v1675 = vld [vmem:[#allocation13 + $0x50] sm:$0xf]
    %v1676 = vld [vmem:[#allocation13 + $0x54] sm:$0xf]
    %v1677 = vld [vmem:[#allocation13 + $0x58] sm:$0xf]
    %v1678 = vld [vmem:[#allocation13 + $0x5c] sm:$0xf]
    %v1679 = vld [vmem:[#allocation13 + $0x60] sm:$0xf]
    %v1680 = vld [vmem:[#allocation13 + $0x64] sm:$0xf]
    %v1681 = vld [vmem:[#allocation13 + $0x68] sm:$0xf]
    %v1682 = vld [vmem:[#allocation13 + $0x6c] sm:$0xf]
    %v1683 = vld [vmem:[#allocation13 + $0x70] sm:$0xf]
    %v1684 = vld [vmem:[#allocation13 + $0x74] sm:$0xf]
    %v1685 = vld [vmem:[#allocation13 + $0x78] sm:$0xf]
    %v1686 = vld [vmem:[#allocation13 + $0x7c] sm:$0xf]
    %v1688 = vlaneseq
    %v1689 = vshrl.u32 %v1688, 7
    %v1690 = vsub.s32 0, %v1689
    %v1691 = vrot.slane %v1518, %v1690
    %v1725 = vunpack.c.l.b16 %v1655
    %v1726 = vunpack.c.l.b16 %v1656
    %v1727 = vunpack.c.l.b16 %v1657
    %v1728 = vunpack.c.l.b16 %v1658
    %v1729 = vunpack.c.l.b16 %v1659
    %v1730 = vunpack.c.l.b16 %v1660
    %v1731 = vunpack.c.l.b16 %v1661
    %v1732 = vunpack.c.l.b16 %v1662
    %v1733 = vunpack.c.l.b16 %v1663
    %v1734 = vunpack.c.l.b16 %v1664
    %v1735 = vunpack.c.l.b16 %v1665
    %v1736 = vunpack.c.l.b16 %v1666
    %v1737 = vunpack.c.l.b16 %v1667
    %v1738 = vunpack.c.l.b16 %v1668
    %v1739 = vunpack.c.l.b16 %v1669
    %v1740 = vunpack.c.l.b16 %v1670
    %v1741 = vunpack.c.l.b16 %v1671
    %v1742 = vunpack.c.l.b16 %v1672
    %v1743 = vunpack.c.l.b16 %v1673
    %v1744 = vunpack.c.l.b16 %v1674
    %v1745 = vunpack.c.l.b16 %v1675
    %v1746 = vunpack.c.l.b16 %v1676
    %v1747 = vunpack.c.l.b16 %v1677
    %v1748 = vunpack.c.l.b16 %v1678
    %v1749 = vunpack.c.l.b16 %v1679
    %v1750 = vunpack.c.l.b16 %v1680
    %v1751 = vunpack.c.l.b16 %v1681
    %v1752 = vunpack.c.l.b16 %v1682
    %v1753 = vunpack.c.l.b16 %v1683
    %v1754 = vunpack.c.l.b16 %v1684
    %v1755 = vunpack.c.l.b16 %v1685
    %v1756 = vunpack.c.l.b16 %v1686
    %v1757 = vpack.c.b16 %v1726, %v1725
    %v1758 = vpack.c.b16 %v1728, %v1727
    %v1759 = vpack.c.b16 %v1730, %v1729
    %v1760 = vpack.c.b16 %v1732, %v1731
    %v1761 = vpack.c.b16 %v1734, %v1733
    %v1762 = vpack.c.b16 %v1736, %v1735
    %v1763 = vpack.c.b16 %v1738, %v1737
    %v1764 = vpack.c.b16 %v1740, %v1739
    %v1765 = vpack.c.b16 %v1742, %v1741
    %v1766 = vpack.c.b16 %v1744, %v1743
    %v1767 = vpack.c.b16 %v1746, %v1745
    %v1768 = vpack.c.b16 %v1748, %v1747
    %v1769 = vpack.c.b16 %v1750, %v1749
    %v1770 = vpack.c.b16 %v1752, %v1751
    %v1771 = vpack.c.b16 %v1754, %v1753
    %v1772 = vpack.c.b16 %v1756, %v1755
    %1789 = vmatprep.subr.bf16.mxu0 0
    %1790 = vmatpush1.bf16.msra.mxu0 %v1757
    %1791 = vmatprep.subr.bf16.mxu0 0
    %1792 = vmatpush1.bf16.msra.mxu0 %v1758
    %1793 = vmatprep.subr.bf16.mxu0 0
    %1794 = vmatpush1.bf16.msra.mxu0 %v1759
    %1795 = vmatprep.subr.bf16.mxu0 0
    %1796 = vmatpush1.bf16.msra.mxu0 %v1760
    %1797 = vmatprep.subr.bf16.mxu0 0
    %1798 = vmatpush1.bf16.msra.mxu0 %v1761
    %1799 = vmatprep.subr.bf16.mxu0 0
    %1800 = vmatpush1.bf16.msra.mxu0 %v1762
    %1801 = vmatprep.subr.bf16.mxu0 0
    %1802 = vmatpush1.bf16.msra.mxu0 %v1763
    %1803 = vmatprep.subr.bf16.mxu0 0
    %1804 = vmatpush1.bf16.msra.mxu0 %v1764
    %1805 = vmatprep.subr.bf16.mxu0 0
    %1806 = vmatpush1.bf16.msra.mxu0 %v1765
    %1807 = vmatprep.subr.bf16.mxu0 0
    %1808 = vmatpush1.bf16.msra.mxu0 %v1766
    %1809 = vmatprep.subr.bf16.mxu0 0
    %1810 = vmatpush1.bf16.msra.mxu0 %v1767
    %1811 = vmatprep.subr.bf16.mxu0 0
    %1812 = vmatpush1.bf16.msra.mxu0 %v1768
    %1813 = vmatprep.subr.bf16.mxu0 0
    %1814 = vmatpush1.bf16.msra.mxu0 %v1769
    %1815 = vmatprep.subr.bf16.mxu0 0
    %1816 = vmatpush1.bf16.msra.mxu0 %v1770
    %1817 = vmatprep.subr.bf16.mxu0 0
    %1818 = vmatpush1.bf16.msra.mxu0 %v1771
    %1819 = vmatprep.subr.bf16.mxu0 0
    %1820 = vmatpush1.bf16.msra.mxu0 %v1772
    %1821 = vmatprep.mubr.bf16.mxu0 %v1654
    %1822 = vmatmul.mubr.bf16.gmra.mrb[0].mxu0 %v1653
    %v1823 = vpop.f32.mrb[0].mxu0
    %v1824 = vadd.f32 %v1691, %v1823
    %v1825 = vpop.f32.mrb[0].mxu0
    %v1826 = vpop.f32.mrb[0].mxu0
    %v1827 = vadd.f32 %v1691, %v1826
    %v1828 = vpop.f32.mrb[0].mxu0
    %1829 = vdwg.mxu0
    %1830 = vst [vmem:[#allocation14] sm:$0xff] %v1824
    %1831 = vst [vmem:[#allocation14 + $0x8] sm:$0xff] %v1827
    // Predicated region
    $region74: #{hse_block_forward.1} parent=1 // pred_check
      _
    $region75: #{hse_block_forward.1} parent=1 // pred_check_branch
      %1833 = sbr.rel (0) target = $region77
    $region76: #{hse_block_forward.1} parent=1 // pred_region
      %s1835 = ssub.s32 256, 256
      %1836 = vsyncadd [#allocation5], %s1835
      %s1837 = sshll.u32 [#allocation14], 4
      %s1838 = int_to_ptr.vmem [resolvable:$true] %s1837
      %1843 = dma.vmem_to_hbm [thread:$0]  %s1838, 256, %s12, [#allocation5], 128, 128, 8
    $region77: #{hse_block_forward.1} parent=1 // pred_fallthru
      _
    // Predicated region
    $region78: #{hse_block_forward.1} parent=1 // pred_check
      _
    $region79: #{hse_block_forward.1} parent=1 // pred_check_branch
      %1845 = sbr.rel (0) target = $region81
    $region80: #{hse_block_forward.1} parent=1 // pred_region
      %1846 = dma.done [#allocation5], 256
    $region81: #{hse_block_forward.1} parent=1 // pred_fallthru
      _
    %1847 = vsyncpa [#allocation4], 1
    %1848 = vsyncpa [#allocation9], 1
    %1849 = vsyncpa [#allocation12], 1
    %1850 = vsyncpa [#allocation5], 1
    %1851 = vsyncpa [#allocation6], 1

</llo_original>
